<compile_context>
chip_gen: v7x
topology: tpu7x:2x2x1
jax: 0.10.0
libtpu: 0.0.40
codegen_flags: <defaults>
</compile_context>

<pallas_src>
import functools

import jax
import jax.numpy as jnp
from jax.experimental import pallas as pl
from jax.experimental.pallas import tpu as pltpu


def lstm_classifier_kernel(x_ref, w_ih_ref, w_hh_ref, b_ref, w_fc_ref,
                           b_fc_ref, out_ref, xw_ref, *, seq_len, batch_tile,
                           hidden_dim):
    T, BT, H = seq_len, batch_tile, hidden_dim
    D = x_ref.shape[-1]

    # Hoisted input projection: one (T*BT, D) @ (D, 4H) MXU matmul.  Result is
    # parked in VMEM scratch (not pinned in the 64-entry vreg file); columns
    # are pre-permuted to [i | f | o | g].
    x2d = x_ref[...].reshape(T * BT, D)
    xw_ref[...] = (jnp.dot(x2d, w_ih_ref[...],
                           preferred_element_type=jnp.float32)
                   + b_ref[...])                                # (T*BT, 4H)

    h = jnp.zeros((BT, H), jnp.float32)
    c = jnp.zeros((BT, H), jnp.float32)

    # Fully unrolled time recurrence (T small and static).  Each step streams
    # its aligned (BT, 4H) xw slice and w_hh from VMEM.
    for t in range(T):
        gates = (xw_ref[t * BT:(t + 1) * BT, :]
                 + jnp.dot(h, w_hh_ref[...],
                           preferred_element_type=jnp.float32))  # (BT, 4H)

        # Gate activations.  If the 3H [i,f,o] boundary is 128-lane aligned,
        # use 2 grouped EUP launches; otherwise (e.g. H=64) activate whole
        # vreg-aligned spans so no masked EUP pass lands on the serial path.
        if (3 * H) % 128 == 0:
            sig = jax.nn.sigmoid(gates[:, :3 * H])
            g_g = jnp.tanh(gates[:, 3 * H:])
        else:
            sig = jax.nn.sigmoid(gates)                 # full 4H, unmasked
            lo = (3 * H) // 128 * 128                   # aligned start <= 3H
            g_g = jnp.tanh(gates[:, lo:])[:, 3 * H - lo:]
        i_g = sig[:, :H]
        f_g = sig[:, H:2 * H]
        o_g = sig[:, 2 * H:3 * H]

        c = f_g * c + i_g * g_g
        h = o_g * jnp.tanh(c)

    # Classifier head on h_T: N=1, so VPU multiply + lane reduction instead of
    # a wasted MXU pass.  b_fc broadcast from a (1,1) tile.
    logits = jnp.sum(h * w_fc_ref[...], axis=-1, keepdims=True) + b_fc_ref[...]
    out_ref[...] = jax.nn.sigmoid(logits)


def _permute_ifgo_to_ifog(a, H):
    """Reorder PyTorch gate blocks [i, f, g, o] -> [i, f, o, g] along axis 0."""
    return jnp.concatenate(
        [a[0:H], a[H:2 * H], a[3 * H:4 * H], a[2 * H:3 * H]], axis=0)


def lstm_classifier(x, w_ih, w_hh, b_ih, b_hh, w_fc, b_fc):
    """x: (B, T, D) batch_first, float32. Returns (B, 1) sigmoid outputs."""
    B, T, D = x.shape
    H = w_hh.shape[1]

    # Batch tile: fill MXU rows (up to 128) per invocation; the grid splits
    # across tiles beyond that and shards across v7x's 2 TCs ("parallel").
    BT = min(128, ((B + 7) // 8) * 8)
    Bp = ((B + BT - 1) // BT) * BT
    nb = Bp // BT

    # Layout plumbing in plain JAX: time-major, batch zero-padded.
    x_tm = jnp.transpose(x, (1, 0, 2))                          # (T, B, D)
    x_tm = jnp.pad(x_tm, ((0, 0), (0, Bp - B), (0, 0)))         # (T, Bp, D)

    w_ih_t = jnp.transpose(_permute_ifgo_to_ifog(w_ih, H))      # (D, 4H)
    w_hh_t = jnp.transpose(_permute_ifgo_to_ifog(w_hh, H))      # (H, 4H)
    b = _permute_ifgo_to_ifog(b_ih + b_hh, H).reshape(1, 4 * H)
    w_fc_row = w_fc.reshape(1, H).astype(jnp.float32)           # (1, H)
    b_fc_2d = b_fc.reshape(1, 1).astype(jnp.float32)            # (1, 1)

    kernel = functools.partial(lstm_classifier_kernel,
                               seq_len=T, batch_tile=BT, hidden_dim=H)

    def full(shape):
        return pl.BlockSpec(shape, lambda i, _s=len(shape): (0,) * _s)

    out = pl.pallas_call(
        kernel,
        out_shape=jax.ShapeDtypeStruct((Bp, 1), jnp.float32),
        grid=(nb,),
        in_specs=[
            pl.BlockSpec((T, BT, D), lambda i: (0, i, 0)),      # x batch tile
            full((D, 4 * H)),                                   # w_ih (once)
            full((H, 4 * H)),                                   # w_hh (once)
            full((1, 4 * H)),                                   # fused bias
            full((1, H)),                                       # fc weight row
            full((1, 1)),                                       # fc bias
        ],
        out_specs=pl.BlockSpec((BT, 1), lambda i: (i, 0)),
        scratch_shapes=[pltpu.VMEM((T * BT, 4 * H), jnp.float32)],
        compiler_params=pltpu.CompilerParams(
            dimension_semantics=("parallel",),
            vmem_limit_bytes=32 * 1024 * 1024,
        ),
    )(x_tm, w_ih_t, w_hh_t, b, w_fc_row, b_fc_2d)

    return out[:B]


def _reference(x, w_ih, w_hh, b_ih, b_hh, w_fc, b_fc):
    B, T, D = x.shape
    H = w_hh.shape[1]
    h = jnp.zeros((B, H), jnp.float32)
    c = jnp.zeros((B, H), jnp.float32)
    for t in range(T):
        g = x[:, t, :] @ w_ih.T + b_ih + h @ w_hh.T + b_hh
        i = jax.nn.sigmoid(g[:, :H])
        f = jax.nn.sigmoid(g[:, H:2 * H])
        gg = jnp.tanh(g[:, 2 * H:3 * H])
        o = jax.nn.sigmoid(g[:, 3 * H:])
        c = f * c + i * gg
        h = o * jnp.tanh(c)
    return jax.nn.sigmoid(h @ w_fc.T + b_fc)


if __name__ == "__main__":
    B, T, D, H = 4, 8, 16, 64   # batch, seq, input_size, hidden_dim

    key = jax.random.PRNGKey(0)
    ks = jax.random.split(key, 7)
    bound = 1.0 / (H ** 0.5)    # PyTorch default uniform(-1/sqrt(H), 1/sqrt(H))

    w_ih = jax.random.uniform(ks[0], (4 * H, D), jnp.float32, -bound, bound)
    w_hh = jax.random.uniform(ks[1], (4 * H, H), jnp.float32, -bound, bound)
    b_ih = jax.random.uniform(ks[2], (4 * H,), jnp.float32, -bound, bound)
    b_hh = jax.random.uniform(ks[3], (4 * H,), jnp.float32, -bound, bound)
    w_fc = jax.random.uniform(ks[4], (1, H), jnp.float32, -bound, bound)
    b_fc = jax.random.uniform(ks[5], (1,), jnp.float32, -bound, bound)
    x = jax.random.normal(ks[6], (B, T, D), jnp.float32)

    out = lstm_classifier(x, w_ih, w_hh, b_ih, b_hh, w_fc, b_fc)
    out = jax.block_until_ready(out)

    ref = _reference(x, w_ih, w_hh, b_ih, b_hh, w_fc, b_fc)
    assert out.shape == (B, 1)
    assert jnp.allclose(out, ref, atol=1e-5, rtol=1e-5)

    print("KERNEL_OK")
</pallas_src>

<mosaic_0001>
module attributes {stable_mosaic.version = 11 : i64} {
  func.func @lstm_classifier_kernel(%arg0: i32, %arg1: memref<8x8x16xf32, #tpu.memory_space<vmem>>, %arg2: memref<16x256xf32, #tpu.memory_space<vmem>>, %arg3: memref<64x256xf32, #tpu.memory_space<vmem>>, %arg4: memref<1x256xf32, #tpu.memory_space<vmem>>, %arg5: memref<1x64xf32, #tpu.memory_space<vmem>>, %arg6: memref<1x1xf32, #tpu.memory_space<vmem>>, %arg7: memref<8x1xf32, #tpu.memory_space<vmem>>, %arg8: memref<64x256xf32, #tpu.memory_space<vmem>>) attributes {dimension_semantics = [#tpu.dimension_semantics<parallel>], iteration_bounds = array<i64: 1>, scalar_prefetch = 0 : i64, scratch_operands = 1 : i64, tpu.core_type = #tpu.core_type<tc>, window_params = [{transform_indices = @transform_0, window_bounds = array<i64: 8, 8, 16>}, {pipeline_mode = #tpu.pipeline_mode<synchronous>, transform_indices = @transform_1, window_bounds = array<i64: 16, 256>}, {pipeline_mode = #tpu.pipeline_mode<synchronous>, transform_indices = @transform_2, window_bounds = array<i64: 64, 256>}, {pipeline_mode = #tpu.pipeline_mode<synchronous>, transform_indices = @transform_3, window_bounds = array<i64: 1, 256>}, {pipeline_mode = #tpu.pipeline_mode<synchronous>, transform_indices = @transform_4, window_bounds = array<i64: 1, 64>}, {pipeline_mode = #tpu.pipeline_mode<synchronous>, transform_indices = @transform_5, window_bounds = array<i64: 1, 1>}, {transform_indices = @transform_6, window_bounds = array<i64: 8, 1>}]} {
    %c0 = arith.constant 0 : index
    %c0_0 = arith.constant 0 : index
    %c0_1 = arith.constant 0 : index
    %0 = vector.load %arg1[%c0, %c0_0, %c0_1] : memref<8x8x16xf32, #tpu.memory_space<vmem>>, vector<8x8x16xf32>
    %1 = vector.shape_cast %0 : vector<8x8x16xf32> to vector<64x16xf32>
    %c0_2 = arith.constant 0 : index
    %c0_3 = arith.constant 0 : index
    %2 = vector.load %arg2[%c0_2, %c0_3] : memref<16x256xf32, #tpu.memory_space<vmem>>, vector<16x256xf32>
    %cst = arith.constant dense<0.000000e+00> : vector<64x256xf32>
    %3 = tpu.matmul %1, %2, %cst {dimension_numbers = #tpu.dot_dimension_numbers<[1], [0], [0], [1], [0, 0, 1, 1], [], []>} : vector<64x16xf32>, vector<16x256xf32>, vector<64x256xf32> -> vector<64x256xf32>
    %c0_4 = arith.constant 0 : index
    %c0_5 = arith.constant 0 : index
    %4 = vector.load %arg4[%c0_4, %c0_5] : memref<1x256xf32, #tpu.memory_space<vmem>>, vector<1x256xf32>
    %5 = vector.broadcast %4 : vector<1x256xf32> to vector<64x256xf32>
    %6 = arith.addf %3, %5 : vector<64x256xf32>
    %c0_6 = arith.constant 0 : index
    %c0_7 = arith.constant 0 : index
    %7 = vector.load %arg8[%c0_6, %c0_7] : memref<64x256xf32, #tpu.memory_space<vmem>>, vector<64x256xf32>
    tpu.vector_store %arg8[%c0_6, %c0_7], %6 {strides = array<i32>} : memref<64x256xf32, #tpu.memory_space<vmem>>, vector<64x256xf32>,
    %cst_8 = arith.constant 0.000000e+00 : f32
    %8 = vector.broadcast %cst_8 : f32 to vector<8x64xf32>
    %cst_9 = arith.constant 0.000000e+00 : f32
    %9 = vector.broadcast %cst_9 : f32 to vector<8x64xf32>
    %c0_10 = arith.constant 0 : index
    %c0_11 = arith.constant 0 : index
    %10 = vector.load %arg8[%c0_10, %c0_11] : memref<64x256xf32, #tpu.memory_space<vmem>>, vector<8x256xf32>
    %c0_12 = arith.constant 0 : index
    %c0_13 = arith.constant 0 : index
    %11 = vector.load %arg3[%c0_12, %c0_13] : memref<64x256xf32, #tpu.memory_space<vmem>>, vector<64x256xf32>
    %cst_14 = arith.constant dense<0.000000e+00> : vector<8x256xf32>
    %12 = tpu.matmul %8, %11, %cst_14 {dimension_numbers = #tpu.dot_dimension_numbers<[1], [0], [0], [1], [0, 0, 1, 1], [], []>} : vector<8x64xf32>, vector<64x256xf32>, vector<8x256xf32> -> vector<8x256xf32>
    %13 = arith.addf %10, %12 : vector<8x256xf32>
    %14 = arith.negf %13 : vector<8x256xf32>
    %15 = math.exp %14 : vector<8x256xf32>
    %cst_15 = arith.constant 1.000000e+00 : f32
    %16 = vector.broadcast %cst_15 : f32 to vector<8x256xf32>
    %17 = arith.addf %16, %15 : vector<8x256xf32>
    %18 = arith.divf %16, %17 : vector<8x256xf32>
    %19 = vector.extract_strided_slice %13 {offsets = [0, 128], sizes = [8, 128], strides = [1, 1]} : vector<8x256xf32> to vector<8x128xf32>
    %20 = math.tanh %19 : vector<8x128xf32>
    %21 = vector.extract_strided_slice %20 {offsets = [0, 64], sizes = [8, 64], strides = [1, 1]} : vector<8x128xf32> to vector<8x64xf32>
    %22 = vector.extract_strided_slice %18 {offsets = [0, 0], sizes = [8, 64], strides = [1, 1]} : vector<8x256xf32> to vector<8x64xf32>
    %23 = vector.extract_strided_slice %18 {offsets = [0, 64], sizes = [8, 64], strides = [1, 1]} : vector<8x256xf32> to vector<8x64xf32>
    %24 = vector.extract_strided_slice %18 {offsets = [0, 128], sizes = [8, 64], strides = [1, 1]} : vector<8x256xf32> to vector<8x64xf32>
    %25 = arith.mulf %23, %9 : vector<8x64xf32>
    %26 = arith.mulf %22, %21 : vector<8x64xf32>
    %27 = arith.addf %25, %26 : vector<8x64xf32>
    %28 = math.tanh %27 : vector<8x64xf32>
    %29 = arith.mulf %24, %28 : vector<8x64xf32>
    %c8 = arith.constant 8 : index
    %c0_16 = arith.constant 0 : index
    %30 = vector.load %arg8[%c8, %c0_16] : memref<64x256xf32, #tpu.memory_space<vmem>>, vector<8x256xf32>
    %c0_17 = arith.constant 0 : index
    %c0_18 = arith.constant 0 : index
    %31 = vector.load %arg3[%c0_17, %c0_18] : memref<64x256xf32, #tpu.memory_space<vmem>>, vector<64x256xf32>
    %cst_19 = arith.constant dense<0.000000e+00> : vector<8x256xf32>
    %32 = tpu.matmul %29, %31, %cst_19 {dimension_numbers = #tpu.dot_dimension_numbers<[1], [0], [0], [1], [0, 0, 1, 1], [], []>} : vector<8x64xf32>, vector<64x256xf32>, vector<8x256xf32> -> vector<8x256xf32>
    %33 = arith.addf %30, %32 : vector<8x256xf32>
    %34 = arith.negf %33 : vector<8x256xf32>
    %35 = math.exp %34 : vector<8x256xf32>
    %cst_20 = arith.constant 1.000000e+00 : f32
    %36 = vector.broadcast %cst_20 : f32 to vector<8x256xf32>
    %37 = arith.addf %36, %35 : vector<8x256xf32>
    %38 = arith.divf %36, %37 : vector<8x256xf32>
    %39 = vector.extract_strided_slice %33 {offsets = [0, 128], sizes = [8, 128], strides = [1, 1]} : vector<8x256xf32> to vector<8x128xf32>
    %40 = math.tanh %39 : vector<8x128xf32>
    %41 = vector.extract_strided_slice %40 {offsets = [0, 64], sizes = [8, 64], strides = [1, 1]} : vector<8x128xf32> to vector<8x64xf32>
    %42 = vector.extract_strided_slice %38 {offsets = [0, 0], sizes = [8, 64], strides = [1, 1]} : vector<8x256xf32> to vector<8x64xf32>
    %43 = vector.extract_strided_slice %38 {offsets = [0, 64], sizes = [8, 64], strides = [1, 1]} : vector<8x256xf32> to vector<8x64xf32>
    %44 = vector.extract_strided_slice %38 {offsets = [0, 128], sizes = [8, 64], strides = [1, 1]} : vector<8x256xf32> to vector<8x64xf32>
    %45 = arith.mulf %43, %27 : vector<8x64xf32>
    %46 = arith.mulf %42, %41 : vector<8x64xf32>
    %47 = arith.addf %45, %46 : vector<8x64xf32>
    %48 = math.tanh %47 : vector<8x64xf32>
    %49 = arith.mulf %44, %48 : vector<8x64xf32>
    %c16 = arith.constant 16 : index
    %c0_21 = arith.constant 0 : index
    %50 = vector.load %arg8[%c16, %c0_21] : memref<64x256xf32, #tpu.memory_space<vmem>>, vector<8x256xf32>
    %c0_22 = arith.constant 0 : index
    %c0_23 = arith.constant 0 : index
    %51 = vector.load %arg3[%c0_22, %c0_23] : memref<64x256xf32, #tpu.memory_space<vmem>>, vector<64x256xf32>
    %cst_24 = arith.constant dense<0.000000e+00> : vector<8x256xf32>
    %52 = tpu.matmul %49, %51, %cst_24 {dimension_numbers = #tpu.dot_dimension_numbers<[1], [0], [0], [1], [0, 0, 1, 1], [], []>} : vector<8x64xf32>, vector<64x256xf32>, vector<8x256xf32> -> vector<8x256xf32>
    %53 = arith.addf %50, %52 : vector<8x256xf32>
    %54 = arith.negf %53 : vector<8x256xf32>
    %55 = math.exp %54 : vector<8x256xf32>
    %cst_25 = arith.constant 1.000000e+00 : f32
    %56 = vector.broadcast %cst_25 : f32 to vector<8x256xf32>
    %57 = arith.addf %56, %55 : vector<8x256xf32>
    %58 = arith.divf %56, %57 : vector<8x256xf32>
    %59 = vector.extract_strided_slice %53 {offsets = [0, 128], sizes = [8, 128], strides = [1, 1]} : vector<8x256xf32> to vector<8x128xf32>
    %60 = math.tanh %59 : vector<8x128xf32>
    %61 = vector.extract_strided_slice %60 {offsets = [0, 64], sizes = [8, 64], strides = [1, 1]} : vector<8x128xf32> to vector<8x64xf32>
    %62 = vector.extract_strided_slice %58 {offsets = [0, 0], sizes = [8, 64], strides = [1, 1]} : vector<8x256xf32> to vector<8x64xf32>
    %63 = vector.extract_strided_slice %58 {offsets = [0, 64], sizes = [8, 64], strides = [1, 1]} : vector<8x256xf32> to vector<8x64xf32>
    %64 = vector.extract_strided_slice %58 {offsets = [0, 128], sizes = [8, 64], strides = [1, 1]} : vector<8x256xf32> to vector<8x64xf32>
    %65 = arith.mulf %63, %47 : vector<8x64xf32>
    %66 = arith.mulf %62, %61 : vector<8x64xf32>
    %67 = arith.addf %65, %66 : vector<8x64xf32>
    %68 = math.tanh %67 : vector<8x64xf32>
    %69 = arith.mulf %64, %68 : vector<8x64xf32>
    %c24 = arith.constant 24 : index
    %c0_26 = arith.constant 0 : index
    %70 = vector.load %arg8[%c24, %c0_26] : memref<64x256xf32, #tpu.memory_space<vmem>>, vector<8x256xf32>
    %c0_27 = arith.constant 0 : index
    %c0_28 = arith.constant 0 : index
    %71 = vector.load %arg3[%c0_27, %c0_28] : memref<64x256xf32, #tpu.memory_space<vmem>>, vector<64x256xf32>
    %cst_29 = arith.constant dense<0.000000e+00> : vector<8x256xf32>
    %72 = tpu.matmul %69, %71, %cst_29 {dimension_numbers = #tpu.dot_dimension_numbers<[1], [0], [0], [1], [0, 0, 1, 1], [], []>} : vector<8x64xf32>, vector<64x256xf32>, vector<8x256xf32> -> vector<8x256xf32>
    %73 = arith.addf %70, %72 : vector<8x256xf32>
    %74 = arith.negf %73 : vector<8x256xf32>
    %75 = math.exp %74 : vector<8x256xf32>
    %cst_30 = arith.constant 1.000000e+00 : f32
    %76 = vector.broadcast %cst_30 : f32 to vector<8x256xf32>
    %77 = arith.addf %76, %75 : vector<8x256xf32>
    %78 = arith.divf %76, %77 : vector<8x256xf32>
    %79 = vector.extract_strided_slice %73 {offsets = [0, 128], sizes = [8, 128], strides = [1, 1]} : vector<8x256xf32> to vector<8x128xf32>
    %80 = math.tanh %79 : vector<8x128xf32>
    %81 = vector.extract_strided_slice %80 {offsets = [0, 64], sizes = [8, 64], strides = [1, 1]} : vector<8x128xf32> to vector<8x64xf32>
    %82 = vector.extract_strided_slice %78 {offsets = [0, 0], sizes = [8, 64], strides = [1, 1]} : vector<8x256xf32> to vector<8x64xf32>
    %83 = vector.extract_strided_slice %78 {offsets = [0, 64], sizes = [8, 64], strides = [1, 1]} : vector<8x256xf32> to vector<8x64xf32>
    %84 = vector.extract_strided_slice %78 {offsets = [0, 128], sizes = [8, 64], strides = [1, 1]} : vector<8x256xf32> to vector<8x64xf32>
    %85 = arith.mulf %83, %67 : vector<8x64xf32>
    %86 = arith.mulf %82, %81 : vector<8x64xf32>
    %87 = arith.addf %85, %86 : vector<8x64xf32>
    %88 = math.tanh %87 : vector<8x64xf32>
    %89 = arith.mulf %84, %88 : vector<8x64xf32>
    %c32 = arith.constant 32 : index
    %c0_31 = arith.constant 0 : index
    %90 = vector.load %arg8[%c32, %c0_31] : memref<64x256xf32, #tpu.memory_space<vmem>>, vector<8x256xf32>
    %c0_32 = arith.constant 0 : index
    %c0_33 = arith.constant 0 : index
    %91 = vector.load %arg3[%c0_32, %c0_33] : memref<64x256xf32, #tpu.memory_space<vmem>>, vector<64x256xf32>
    %cst_34 = arith.constant dense<0.000000e+00> : vector<8x256xf32>
    %92 = tpu.matmul %89, %91, %cst_34 {dimension_numbers = #tpu.dot_dimension_numbers<[1], [0], [0], [1], [0, 0, 1, 1], [], []>} : vector<8x64xf32>, vector<64x256xf32>, vector<8x256xf32> -> vector<8x256xf32>
    %93 = arith.addf %90, %92 : vector<8x256xf32>
    %94 = arith.negf %93 : vector<8x256xf32>
    %95 = math.exp %94 : vector<8x256xf32>
    %cst_35 = arith.constant 1.000000e+00 : f32
    %96 = vector.broadcast %cst_35 : f32 to vector<8x256xf32>
    %97 = arith.addf %96, %95 : vector<8x256xf32>
    %98 = arith.divf %96, %97 : vector<8x256xf32>
    %99 = vector.extract_strided_slice %93 {offsets = [0, 128], sizes = [8, 128], strides = [1, 1]} : vector<8x256xf32> to vector<8x128xf32>
    %100 = math.tanh %99 : vector<8x128xf32>
    %101 = vector.extract_strided_slice %100 {offsets = [0, 64], sizes = [8, 64], strides = [1, 1]} : vector<8x128xf32> to vector<8x64xf32>
    %102 = vector.extract_strided_slice %98 {offsets = [0, 0], sizes = [8, 64], strides = [1, 1]} : vector<8x256xf32> to vector<8x64xf32>
    %103 = vector.extract_strided_slice %98 {offsets = [0, 64], sizes = [8, 64], strides = [1, 1]} : vector<8x256xf32> to vector<8x64xf32>
    %104 = vector.extract_strided_slice %98 {offsets = [0, 128], sizes = [8, 64], strides = [1, 1]} : vector<8x256xf32> to vector<8x64xf32>
    %105 = arith.mulf %103, %87 : vector<8x64xf32>
    %106 = arith.mulf %102, %101 : vector<8x64xf32>
    %107 = arith.addf %105, %106 : vector<8x64xf32>
    %108 = math.tanh %107 : vector<8x64xf32>
    %109 = arith.mulf %104, %108 : vector<8x64xf32>
    %c40 = arith.constant 40 : index
    %c0_36 = arith.constant 0 : index
    %110 = vector.load %arg8[%c40, %c0_36] : memref<64x256xf32, #tpu.memory_space<vmem>>, vector<8x256xf32>
    %c0_37 = arith.constant 0 : index
    %c0_38 = arith.constant 0 : index
    %111 = vector.load %arg3[%c0_37, %c0_38] : memref<64x256xf32, #tpu.memory_space<vmem>>, vector<64x256xf32>
    %cst_39 = arith.constant dense<0.000000e+00> : vector<8x256xf32>
    %112 = tpu.matmul %109, %111, %cst_39 {dimension_numbers = #tpu.dot_dimension_numbers<[1], [0], [0], [1], [0, 0, 1, 1], [], []>} : vector<8x64xf32>, vector<64x256xf32>, vector<8x256xf32> -> vector<8x256xf32>
    %113 = arith.addf %110, %112 : vector<8x256xf32>
    %114 = arith.negf %113 : vector<8x256xf32>
    %115 = math.exp %114 : vector<8x256xf32>
    %cst_40 = arith.constant 1.000000e+00 : f32
    %116 = vector.broadcast %cst_40 : f32 to vector<8x256xf32>
    %117 = arith.addf %116, %115 : vector<8x256xf32>
    %118 = arith.divf %116, %117 : vector<8x256xf32>
    %119 = vector.extract_strided_slice %113 {offsets = [0, 128], sizes = [8, 128], strides = [1, 1]} : vector<8x256xf32> to vector<8x128xf32>
    %120 = math.tanh %119 : vector<8x128xf32>
    %121 = vector.extract_strided_slice %120 {offsets = [0, 64], sizes = [8, 64], strides = [1, 1]} : vector<8x128xf32> to vector<8x64xf32>
    %122 = vector.extract_strided_slice %118 {offsets = [0, 0], sizes = [8, 64], strides = [1, 1]} : vector<8x256xf32> to vector<8x64xf32>
    %123 = vector.extract_strided_slice %118 {offsets = [0, 64], sizes = [8, 64], strides = [1, 1]} : vector<8x256xf32> to vector<8x64xf32>
    %124 = vector.extract_strided_slice %118 {offsets = [0, 128], sizes = [8, 64], strides = [1, 1]} : vector<8x256xf32> to vector<8x64xf32>
    %125 = arith.mulf %123, %107 : vector<8x64xf32>
    %126 = arith.mulf %122, %121 : vector<8x64xf32>
    %127 = arith.addf %125, %126 : vector<8x64xf32>
    %128 = math.tanh %127 : vector<8x64xf32>
    %129 = arith.mulf %124, %128 : vector<8x64xf32>
    %c48 = arith.constant 48 : index
    %c0_41 = arith.constant 0 : index
    %130 = vector.load %arg8[%c48, %c0_41] : memref<64x256xf32, #tpu.memory_space<vmem>>, vector<8x256xf32>
    %c0_42 = arith.constant 0 : index
    %c0_43 = arith.constant 0 : index
    %131 = vector.load %arg3[%c0_42, %c0_43] : memref<64x256xf32, #tpu.memory_space<vmem>>, vector<64x256xf32>
    %cst_44 = arith.constant dense<0.000000e+00> : vector<8x256xf32>
    %132 = tpu.matmul %129, %131, %cst_44 {dimension_numbers = #tpu.dot_dimension_numbers<[1], [0], [0], [1], [0, 0, 1, 1], [], []>} : vector<8x64xf32>, vector<64x256xf32>, vector<8x256xf32> -> vector<8x256xf32>
    %133 = arith.addf %130, %132 : vector<8x256xf32>
    %134 = arith.negf %133 : vector<8x256xf32>
    %135 = math.exp %134 : vector<8x256xf32>
    %cst_45 = arith.constant 1.000000e+00 : f32
    %136 = vector.broadcast %cst_45 : f32 to vector<8x256xf32>
    %137 = arith.addf %136, %135 : vector<8x256xf32>
    %138 = arith.divf %136, %137 : vector<8x256xf32>
    %139 = vector.extract_strided_slice %133 {offsets = [0, 128], sizes = [8, 128], strides = [1, 1]} : vector<8x256xf32> to vector<8x128xf32>
    %140 = math.tanh %139 : vector<8x128xf32>
    %141 = vector.extract_strided_slice %140 {offsets = [0, 64], sizes = [8, 64], strides = [1, 1]} : vector<8x128xf32> to vector<8x64xf32>
    %142 = vector.extract_strided_slice %138 {offsets = [0, 0], sizes = [8, 64], strides = [1, 1]} : vector<8x256xf32> to vector<8x64xf32>
    %143 = vector.extract_strided_slice %138 {offsets = [0, 64], sizes = [8, 64], strides = [1, 1]} : vector<8x256xf32> to vector<8x64xf32>
    %144 = vector.extract_strided_slice %138 {offsets = [0, 128], sizes = [8, 64], strides = [1, 1]} : vector<8x256xf32> to vector<8x64xf32>
    %145 = arith.mulf %143, %127 : vector<8x64xf32>
    %146 = arith.mulf %142, %141 : vector<8x64xf32>
    %147 = arith.addf %145, %146 : vector<8x64xf32>
    %148 = math.tanh %147 : vector<8x64xf32>
    %149 = arith.mulf %144, %148 : vector<8x64xf32>
    %c56 = arith.constant 56 : index
    %c0_46 = arith.constant 0 : index
    %150 = vector.load %arg8[%c56, %c0_46] : memref<64x256xf32, #tpu.memory_space<vmem>>, vector<8x256xf32>
    %c0_47 = arith.constant 0 : index
    %c0_48 = arith.constant 0 : index
    %151 = vector.load %arg3[%c0_47, %c0_48] : memref<64x256xf32, #tpu.memory_space<vmem>>, vector<64x256xf32>
    %cst_49 = arith.constant dense<0.000000e+00> : vector<8x256xf32>
    %152 = tpu.matmul %149, %151, %cst_49 {dimension_numbers = #tpu.dot_dimension_numbers<[1], [0], [0], [1], [0, 0, 1, 1], [], []>} : vector<8x64xf32>, vector<64x256xf32>, vector<8x256xf32> -> vector<8x256xf32>
    %153 = arith.addf %150, %152 : vector<8x256xf32>
    %154 = arith.negf %153 : vector<8x256xf32>
    %155 = math.exp %154 : vector<8x256xf32>
    %cst_50 = arith.constant 1.000000e+00 : f32
    %156 = vector.broadcast %cst_50 : f32 to vector<8x256xf32>
    %157 = arith.addf %156, %155 : vector<8x256xf32>
    %158 = arith.divf %156, %157 : vector<8x256xf32>
    %159 = vector.extract_strided_slice %153 {offsets = [0, 128], sizes = [8, 128], strides = [1, 1]} : vector<8x256xf32> to vector<8x128xf32>
    %160 = math.tanh %159 : vector<8x128xf32>
    %161 = vector.extract_strided_slice %160 {offsets = [0, 64], sizes = [8, 64], strides = [1, 1]} : vector<8x128xf32> to vector<8x64xf32>
    %162 = vector.extract_strided_slice %158 {offsets = [0, 0], sizes = [8, 64], strides = [1, 1]} : vector<8x256xf32> to vector<8x64xf32>
    %163 = vector.extract_strided_slice %158 {offsets = [0, 64], sizes = [8, 64], strides = [1, 1]} : vector<8x256xf32> to vector<8x64xf32>
    %164 = vector.extract_strided_slice %158 {offsets = [0, 128], sizes = [8, 64], strides = [1, 1]} : vector<8x256xf32> to vector<8x64xf32>
    %165 = arith.mulf %163, %147 : vector<8x64xf32>
    %166 = arith.mulf %162, %161 : vector<8x64xf32>
    %167 = arith.addf %165, %166 : vector<8x64xf32>
    %168 = math.tanh %167 : vector<8x64xf32>
    %169 = arith.mulf %164, %168 : vector<8x64xf32>
    %c0_51 = arith.constant 0 : index
    %c0_52 = arith.constant 0 : index
    %170 = vector.load %arg5[%c0_51, %c0_52] : memref<1x64xf32, #tpu.memory_space<vmem>>, vector<1x64xf32>
    %171 = vector.broadcast %170 : vector<1x64xf32> to vector<8x64xf32>
    %172 = arith.mulf %169, %171 : vector<8x64xf32>
    %cst_53 = arith.constant dense<0.000000e+00> : vector<8xf32>
    %173 = vector.multi_reduction <add>, %172, %cst_53 [1] : vector<8x64xf32> to vector<8xf32>
    %174 = vector.shape_cast %173 : vector<8xf32> to vector<8x1xf32>
    %c0_54 = arith.constant 0 : index
    %c0_55 = arith.constant 0 : index
    %175 = vector.load %arg6[%c0_54, %c0_55] : memref<1x1xf32, #tpu.memory_space<vmem>>, vector<1x1xf32>
    %176 = vector.broadcast %175 : vector<1x1xf32> to vector<8x1xf32>
    %177 = arith.addf %174, %176 : vector<8x1xf32>
    %178 = arith.negf %177 : vector<8x1xf32>
    %179 = math.exp %178 : vector<8x1xf32>
    %cst_56 = arith.constant 1.000000e+00 : f32
    %180 = vector.broadcast %cst_56 : f32 to vector<8x1xf32>
    %181 = arith.addf %180, %179 : vector<8x1xf32>
    %182 = arith.divf %180, %181 : vector<8x1xf32>
    %c0_57 = arith.constant 0 : index
    %c0_58 = arith.constant 0 : index
    %183 = vector.load %arg7[%c0_57, %c0_58] : memref<8x1xf32, #tpu.memory_space<vmem>>, vector<8x1xf32>
    tpu.vector_store %arg7[%c0_57, %c0_58], %182 {strides = array<i32>} : memref<8x1xf32, #tpu.memory_space<vmem>>, vector<8x1xf32>,
    return
  }
  func.func @transform_0(%arg0: i32) -> (i32, i32, i32) {
    %c0_i32 = arith.constant 0 : i32
    %c0_i32_0 = arith.constant 0 : i32
    %c0_i32_1 = arith.constant 0 : i32
    return %c0_i32, %arg0, %c0_i32_0 : i32, i32, i32
  }
  func.func @transform_1(%arg0: i32) -> (i32, i32) {
    %c0_i32 = arith.constant 0 : i32
    %c0_i32_0 = arith.constant 0 : i32
    %c0_i32_1 = arith.constant 0 : i32
    return %c0_i32, %c0_i32_0 : i32, i32
  }
  func.func @transform_2(%arg0: i32) -> (i32, i32) {
    %c0_i32 = arith.constant 0 : i32
    %c0_i32_0 = arith.constant 0 : i32
    %c0_i32_1 = arith.constant 0 : i32
    return %c0_i32, %c0_i32_0 : i32, i32
  }
  func.func @transform_3(%arg0: i32) -> (i32, i32) {
    %c0_i32 = arith.constant 0 : i32
    %c0_i32_0 = arith.constant 0 : i32
    %c0_i32_1 = arith.constant 0 : i32
    return %c0_i32, %c0_i32_0 : i32, i32
  }
  func.func @transform_4(%arg0: i32) -> (i32, i32) {
    %c0_i32 = arith.constant 0 : i32
    %c0_i32_0 = arith.constant 0 : i32
    %c0_i32_1 = arith.constant 0 : i32
    return %c0_i32, %c0_i32_0 : i32, i32
  }
  func.func @transform_5(%arg0: i32) -> (i32, i32) {
    %c0_i32 = arith.constant 0 : i32
    %c0_i32_0 = arith.constant 0 : i32
    %c0_i32_1 = arith.constant 0 : i32
    return %c0_i32, %c0_i32_0 : i32, i32
  }
  func.func @transform_6(%arg0: i32) -> (i32, i32) {
    %c0_i32 = arith.constant 0 : i32
    %c0_i32_0 = arith.constant 0 : i32
    return %arg0, %c0_i32 : i32, i32
  }
}

</mosaic_0001>

<llo_original>
// kernel: tpu_custom_call.1
$region0: #{tpu_custom_call.1}
  #allocation0 [shape = 'u32[]', space=smem, size = 0x4, offset = 0x4, fixed_abs, tag = 'smem constant byte address 0x4 - core index']
  #allocation1 [shape = 'u32[144,128]{1,0:T(1,128)}', space=vmem, size = 0x12000, scoped, tag = 'internal scratch']
  #allocation2 [shape = 'f32[64,256]{1,0:T(8,128)}', space=vmem, size = 0x10000, scoped, tag = 'scratch operand']
  #allocation3 [shape = 'f32[1,1]{1,0:T(1,128)S(1)}', space=vmem, size = 0x200, scoped, tag = 'scoped memory for tpu_custom_call.1']
  %s0 = inlined_call_operand.hbm [shape: f32[8,8,16], index: 0, kind: input, shape index: {}]
  %s1 = inlined_call_operand.hbm [shape: f32[16,256], index: 1, kind: input, shape index: {}]
  %s2 = inlined_call_operand.hbm [shape: f32[64,256], index: 2, kind: input, shape index: {}]
  %s3 = inlined_call_operand.vmem [shape: f32[1,256], index: 3, kind: input, shape index: {}]
  %s4 = inlined_call_operand.vmem [shape: f32[1,64], index: 4, kind: input, shape index: {}]
  %s5 = inlined_call_operand.<no memory space> [shape: f32[1,1], index: 5, kind: input, shape index: {}]
  %s6 = inlined_call_operand.vmem [shape: f32[8,1], index: 6, kind: output, shape index: {}]
  %s7 = sld [smem:[#allocation0]]
  $region46: #{tpu_custom_call.1} parent=0
    _
  %s9 = ssub.s32 1, %s7
  %s10 = scalar_select 0, %s9, %s7
  %v11 = vstv %s5
  %12 = vst [vmem:[#allocation3] sm:$0x1] %v11
  $region1: #{tpu_custom_call.1} parent=0
    #allocation4 [shape = 'u8[32768]{0}', space=vmem, size = 0x8000, scoped, tag = 'input window, operand 0, single buffered']
    #allocation5 [shape = 's32[1]{0}', space=sflag, size = 0x4, scoped, tag = 'scoped memory for tpu_custom_call.1']
    #allocation6 [shape = 'u8[16384]{0}', space=vmem, size = 0x4000, scoped, tag = 'input window, operand 1, single buffered']
    #allocation7 [shape = 's32[1]{0}', space=sflag, size = 0x4, scoped, tag = 'scoped memory for tpu_custom_call.1']
    #allocation8 [shape = 'u8[65536]{0}', space=vmem, size = 0x10000, scoped, tag = 'input window, operand 2, single buffered']
    %13 = vsyncpa [#allocation5], 0
    %14 = vsyncpa [#allocation7], 0
    // Predicated region
    $region2: #{tpu_custom_call.1} parent=1 // pred_check
      _
    $region3: #{tpu_custom_call.1} parent=1 // pred_check_branch
      %16 = sbr.rel (0) target = $region5
    $region4: #{tpu_custom_call.1} parent=1 // pred_region
      %s18 = ssub.s32 1024, 1024
      %19 = vsyncadd [#allocation5], %s18
      %s20 = sshll.u32 [#allocation4], 4
      %s21 = int_to_ptr.vmem [resolvable:$true] %s20
      %26 = dma.hbm_to_vmem [thread:$0]  %s0, 1024, %s21, [#allocation5], 128, 128, 8
    $region5: #{tpu_custom_call.1} parent=1 // pred_fallthru
      _
    // Predicated region
    $region6: #{tpu_custom_call.1} parent=1 // pred_check
      _
    $region7: #{tpu_custom_call.1} parent=1 // pred_check_branch
      %28 = sbr.rel (0) target = $region9
    $region8: #{tpu_custom_call.1} parent=1 // pred_region
      %s30 = ssub.s32 512, 512
      %31 = vsyncadd [#allocation7], %s30
      %s32 = sshll.u32 [#allocation6], 4
      %s33 = int_to_ptr.vmem [resolvable:$true] %s32
      %38 = dma.hbm_to_vmem [thread:$0]  %s1, 512, %s33, [#allocation7], 256, 256, 16
    $region9: #{tpu_custom_call.1} parent=1 // pred_fallthru
      _
    // Predicated region
    $region10: #{tpu_custom_call.1} parent=1 // pred_check
      _
    $region11: #{tpu_custom_call.1} parent=1 // pred_check_branch
      %40 = sbr.rel (0) target = $region13
    $region12: #{tpu_custom_call.1} parent=1 // pred_region
      %s42 = ssub.s32 2048, 2048
      %43 = vsyncadd [#allocation7], %s42
      %s44 = sshll.u32 [#allocation8], 4
      %s45 = int_to_ptr.vmem [resolvable:$true] %s44
      %50 = dma.hbm_to_vmem [thread:$0]  %s2, 2048, %s45, [#allocation7], 256, 256, 16
    $region13: #{tpu_custom_call.1} parent=1 // pred_fallthru
      _
    // Predicated region
    $region14: #{tpu_custom_call.1} parent=1 // pred_check
      _
    $region15: #{tpu_custom_call.1} parent=1 // pred_check_branch
      %52 = sbr.rel (0) target = $region17
    $region16: #{tpu_custom_call.1} parent=1 // pred_region
      _
    $region17: #{tpu_custom_call.1} parent=1 // pred_fallthru
      _
    // Predicated region
    $region18: #{tpu_custom_call.1} parent=1 // pred_check
      _
    $region19: #{tpu_custom_call.1} parent=1 // pred_check_branch
      %54 = sbr.rel (0) target = $region21
    $region20: #{tpu_custom_call.1} parent=1 // pred_region
      _
    $region21: #{tpu_custom_call.1} parent=1 // pred_fallthru
      _
    // Predicated region
    $region22: #{tpu_custom_call.1} parent=1 // pred_check
      _
    $region23: #{tpu_custom_call.1} parent=1 // pred_check_branch
      %56 = sbr.rel (0) target = $region25
    $region24: #{tpu_custom_call.1} parent=1 // pred_region
      _
    $region25: #{tpu_custom_call.1} parent=1 // pred_fallthru
      _
    // Predicated region
    $region26: #{tpu_custom_call.1} parent=1 // pred_check
      _
    $region27: #{tpu_custom_call.1} parent=1 // pred_check_branch
      %58 = sbr.rel (0) target = $region29
    $region28: #{tpu_custom_call.1} parent=1 // pred_region
      %59 = dma.done [#allocation5], 1024
    $region29: #{tpu_custom_call.1} parent=1 // pred_fallthru
      _
    // Predicated region
    $region30: #{tpu_custom_call.1} parent=1 // pred_check
      _
    $region31: #{tpu_custom_call.1} parent=1 // pred_check_branch
      %61 = sbr.rel (0) target = $region33
    $region32: #{tpu_custom_call.1} parent=1 // pred_region
      %62 = dma.done [#allocation7], 512
    $region33: #{tpu_custom_call.1} parent=1 // pred_fallthru
      _
    // Predicated region
    $region34: #{tpu_custom_call.1} parent=1 // pred_check
      _
    $region35: #{tpu_custom_call.1} parent=1 // pred_check_branch
      %64 = sbr.rel (0) target = $region37
    $region36: #{tpu_custom_call.1} parent=1 // pred_region
      %65 = dma.done [#allocation7], 2048
    $region37: #{tpu_custom_call.1} parent=1 // pred_fallthru
      _
    %v66 = vld [vmem:[#allocation4] sm:$0xff]
    %v67 = vld [vmem:[#allocation4 + $0x8] sm:$0xff]
    %v68 = vld [vmem:[#allocation4 + $0x10] sm:$0xff]
    %v69 = vld [vmem:[#allocation4 + $0x18] sm:$0xff]
    %v70 = vld [vmem:[#allocation4 + $0x20] sm:$0xff]
    %v71 = vld [vmem:[#allocation4 + $0x28] sm:$0xff]
    %v72 = vld [vmem:[#allocation4 + $0x30] sm:$0xff]
    %v73 = vld [vmem:[#allocation4 + $0x38] sm:$0xff]
    %v74 = vld [vmem:[#allocation6] sm:$0xff]
    %v75 = vld [vmem:[#allocation6 + $0x8] sm:$0xff]
    %v76 = vld [vmem:[#allocation6 + $0x10] sm:$0xff]
    %v77 = vld [vmem:[#allocation6 + $0x18] sm:$0xff]
    %v78 = vld [vmem:[%s3] sm:$0x3]
    %v80 = vlaneseq
    %v81 = vshrl.u32 %v80, 7
    %v82 = vsub.s32 0, %v81
    %v83 = vrot.slane %v78, %v82
    %v84 = vlaneseq
    %v85 = vshrl.u32 %v84, 7
    %v86 = vsub.s32 1, %v85
    %v87 = vrot.slane %v78, %v86
    %vm90 = vcmask 130048
    %v92 = vsel %vm90, %v66, 0
    %v95 = vsel %vm90, %v67, 0
    %v98 = vsel %vm90, %v68, 0
    %v101 = vsel %vm90, %v69, 0
    %v104 = vsel %vm90, %v70, 0
    %v107 = vsel %vm90, %v71, 0
    %v110 = vsel %vm90, %v72, 0
    %v113 = vsel %vm90, %v73, 0
    %115 = vmatprep.subr.mxu0 %v75
    %116 = vmatpush1.msra.mxu0 %v74
    %117 = vmatprep.subr.mxu0 %v77
    %118 = vmatpush1.msra.mxu0 %v76
    %119 = vmatprep.subr.mxu0 0.0
    %120 = vmatpush1.msra.mxu0 0.0
    %121 = vmatprep.subr.mxu0 0.0
    %122 = vmatpush1.msra.mxu0 0.0
    %123 = vmatprep.subr.mxu0 0.0
    %124 = vmatpush1.msra.mxu0 0.0
    %125 = vmatprep.subr.mxu0 0.0
    %126 = vmatpush1.msra.mxu0 0.0
    %127 = vmatprep.subr.mxu0 0.0
    %128 = vmatpush1.msra.mxu0 0.0
    %129 = vmatprep.subr.mxu0 0.0
    %130 = vmatpush1.msra.mxu0 0.0
    %131 = vmatprep.subr.mxu0 0.0
    %132 = vmatpush1.msra.mxu0 0.0
    %133 = vmatprep.subr.mxu0 0.0
    %134 = vmatpush1.msra.mxu0 0.0
    %135 = vmatprep.subr.mxu0 0.0
    %136 = vmatpush1.msra.mxu0 0.0
    %137 = vmatprep.subr.mxu0 0.0
    %138 = vmatpush1.msra.mxu0 0.0
    %139 = vmatprep.subr.mxu0 0.0
    %140 = vmatpush1.msra.mxu0 0.0
    %141 = vmatprep.subr.mxu0 0.0
    %142 = vmatpush1.msra.mxu0 0.0
    %143 = vmatprep.subr.mxu0 0.0
    %144 = vmatpush1.msra.mxu0 0.0
    %145 = vmatprep.subr.mxu0 0.0
    %146 = vmatpush1.msra.mxu0 0.0
    %147 = vmatprep.subr.mxu0 0.0
    %148 = vmatpush1.msra.mxu0 0.0
    %149 = vmatprep.subr.mxu0 0.0
    %150 = vmatpush1.msra.mxu0 0.0
    %151 = vmatprep.subr.mxu0 0.0
    %152 = vmatpush1.msra.mxu0 0.0
    %153 = vmatprep.subr.mxu0 0.0
    %154 = vmatpush1.msra.mxu0 0.0
    %155 = vmatprep.subr.mxu0 0.0
    %156 = vmatpush1.msra.mxu0 0.0
    %157 = vmatprep.subr.mxu0 0.0
    %158 = vmatpush1.msra.mxu0 0.0
    %159 = vmatprep.subr.mxu0 0.0
    %160 = vmatpush1.msra.mxu0 0.0
    %161 = vmatprep.subr.mxu0 0.0
    %162 = vmatpush1.msra.mxu0 0.0
    %163 = vmatprep.subr.mxu0 0.0
    %164 = vmatpush1.msra.mxu0 0.0
    %165 = vmatprep.subr.mxu0 0.0
    %166 = vmatpush1.msra.mxu0 0.0
    %167 = vmatprep.subr.mxu0 0.0
    %168 = vmatpush1.msra.mxu0 0.0
    %169 = vmatprep.subr.mxu0 0.0
    %170 = vmatpush1.msra.mxu0 0.0
    %171 = vmatprep.subr.mxu0 0.0
    %172 = vmatpush1.msra.mxu0 0.0
    %173 = vmatprep.subr.mxu0 0.0
    %174 = vmatpush1.msra.mxu0 0.0
    %175 = vmatprep.subr.mxu0 0.0
    %176 = vmatpush1.msra.mxu0 0.0
    %177 = vmatprep.subr.mxu0 0.0
    %178 = vmatpush1.msra.mxu0 0.0
    %179 = vmatprep.mubr.f32.mxu0 0.0
    %180 = vmatmul.mubr.f32.gmra.mrb[0].mxu0 %v92
    %v181 = vpop.f32.mrb[0].mxu0
    %v182 = vadd.f32 %v83, %v181
    %v183 = vpop.f32.mrb[0].mxu0
    %v184 = vadd.f32 %v87, %v183
    %185 = vmatprep.mubr.f32.mxu0 0.0
    %186 = vmatmul.mubr.f32.gmra.mrb[0].mxu0 %v95
    %v187 = vpop.f32.mrb[0].mxu0
    %v188 = vadd.f32 %v83, %v187
    %v189 = vpop.f32.mrb[0].mxu0
    %v190 = vadd.f32 %v87, %v189
    %191 = vmatprep.mubr.f32.mxu0 0.0
    %192 = vmatmul.mubr.f32.gmra.mrb[0].mxu0 %v98
    %v193 = vpop.f32.mrb[0].mxu0
    %v194 = vadd.f32 %v83, %v193
    %v195 = vpop.f32.mrb[0].mxu0
    %v196 = vadd.f32 %v87, %v195
    %197 = vmatprep.mubr.f32.mxu0 0.0
    %198 = vmatmul.mubr.f32.gmra.mrb[0].mxu0 %v101
    %v199 = vpop.f32.mrb[0].mxu0
    %v200 = vadd.f32 %v83, %v199
    %v201 = vpop.f32.mrb[0].mxu0
    %v202 = vadd.f32 %v87, %v201
    %203 = vmatprep.mubr.f32.mxu0 0.0
    %204 = vmatmul.mubr.f32.gmra.mrb[0].mxu0 %v104
    %v205 = vpop.f32.mrb[0].mxu0
    %v206 = vadd.f32 %v83, %v205
    %v207 = vpop.f32.mrb[0].mxu0
    %v208 = vadd.f32 %v87, %v207
    %209 = vmatprep.mubr.f32.mxu0 0.0
    %210 = vmatmul.mubr.f32.gmra.mrb[0].mxu0 %v107
    %v211 = vpop.f32.mrb[0].mxu0
    %v212 = vadd.f32 %v83, %v211
    %v213 = vpop.f32.mrb[0].mxu0
    %v214 = vadd.f32 %v87, %v213
    %215 = vmatprep.mubr.f32.mxu0 0.0
    %216 = vmatmul.mubr.f32.gmra.mrb[0].mxu0 %v110
    %v217 = vpop.f32.mrb[0].mxu0
    %v218 = vadd.f32 %v83, %v217
    %v219 = vpop.f32.mrb[0].mxu0
    %v220 = vadd.f32 %v87, %v219
    %221 = vmatprep.mubr.f32.mxu0 0.0
    %222 = vmatmul.mubr.f32.gmra.mrb[0].mxu0 %v113
    %v223 = vpop.f32.mrb[0].mxu0
    %v224 = vadd.f32 %v83, %v223
    %v225 = vpop.f32.mrb[0].mxu0
    %v226 = vadd.f32 %v87, %v225
    %227 = vdwg.mxu0
    %228 = vst [vmem:[#allocation2] sm:$0xff] %v182
    %229 = vst [vmem:[#allocation2 + $0x8] sm:$0xff] %v184
    %230 = vst [vmem:[#allocation2 + $0x10] sm:$0xff] %v188
    %231 = vst [vmem:[#allocation2 + $0x18] sm:$0xff] %v190
    %232 = vst [vmem:[#allocation2 + $0x20] sm:$0xff] %v194
    %233 = vst [vmem:[#allocation2 + $0x28] sm:$0xff] %v196
    %234 = vst [vmem:[#allocation2 + $0x30] sm:$0xff] %v200
    %235 = vst [vmem:[#allocation2 + $0x38] sm:$0xff] %v202
    %236 = vst [vmem:[#allocation2 + $0x40] sm:$0xff] %v206
    %237 = vst [vmem:[#allocation2 + $0x48] sm:$0xff] %v208
    %238 = vst [vmem:[#allocation2 + $0x50] sm:$0xff] %v212
    %239 = vst [vmem:[#allocation2 + $0x58] sm:$0xff] %v214
    %240 = vst [vmem:[#allocation2 + $0x60] sm:$0xff] %v218
    %241 = vst [vmem:[#allocation2 + $0x68] sm:$0xff] %v220
    %242 = vst [vmem:[#allocation2 + $0x70] sm:$0xff] %v224
    %243 = vst [vmem:[#allocation2 + $0x78] sm:$0xff] %v226
    %v244 = vld [vmem:[#allocation2] sm:$0xff]
    %v245 = vld [vmem:[#allocation2 + $0x8] sm:$0xff]
    %v246 = vld [vmem:[#allocation8] sm:$0xff]
    %v247 = vld [vmem:[#allocation8 + $0x8] sm:$0xff]
    %v248 = vld [vmem:[#allocation8 + $0x10] sm:$0xff]
    %v249 = vld [vmem:[#allocation8 + $0x18] sm:$0xff]
    %v250 = vld [vmem:[#allocation8 + $0x20] sm:$0xff]
    %v251 = vld [vmem:[#allocation8 + $0x28] sm:$0xff]
    %v252 = vld [vmem:[#allocation8 + $0x30] sm:$0xff]
    %v253 = vld [vmem:[#allocation8 + $0x38] sm:$0xff]
    %v254 = vld [vmem:[#allocation8 + $0x40] sm:$0xff]
    %v255 = vld [vmem:[#allocation8 + $0x48] sm:$0xff]
    %v256 = vld [vmem:[#allocation8 + $0x50] sm:$0xff]
    %v257 = vld [vmem:[#allocation8 + $0x58] sm:$0xff]
    %v258 = vld [vmem:[#allocation8 + $0x60] sm:$0xff]
    %v259 = vld [vmem:[#allocation8 + $0x68] sm:$0xff]
    %v260 = vld [vmem:[#allocation8 + $0x70] sm:$0xff]
    %v261 = vld [vmem:[#allocation8 + $0x78] sm:$0xff]
    %vm262 = vcmask 523264
    %v264 = vsel %vm262, 0.0, 0
    %266 = vmatprep.subr.mxu0 %v247
    %267 = vmatpush1.msra.mxu0 %v246
    %268 = vmatprep.subr.mxu0 %v249
    %269 = vmatpush1.msra.mxu0 %v248
    %270 = vmatprep.subr.mxu0 %v251
    %271 = vmatpush1.msra.mxu0 %v250
    %272 = vmatprep.subr.mxu0 %v253
    %273 = vmatpush1.msra.mxu0 %v252
    %274 = vmatprep.subr.mxu0 %v255
    %275 = vmatpush1.msra.mxu0 %v254
    %276 = vmatprep.subr.mxu0 %v257
    %277 = vmatpush1.msra.mxu0 %v256
    %278 = vmatprep.subr.mxu0 %v259
    %279 = vmatpush1.msra.mxu0 %v258
    %280 = vmatprep.subr.mxu0 %v261
    %281 = vmatpush1.msra.mxu0 %v260
    %282 = vmatprep.subr.mxu0 0.0
    %283 = vmatpush1.msra.mxu0 0.0
    %284 = vmatprep.subr.mxu0 0.0
    %285 = vmatpush1.msra.mxu0 0.0
    %286 = vmatprep.subr.mxu0 0.0
    %287 = vmatpush1.msra.mxu0 0.0
    %288 = vmatprep.subr.mxu0 0.0
    %289 = vmatpush1.msra.mxu0 0.0
    %290 = vmatprep.subr.mxu0 0.0
    %291 = vmatpush1.msra.mxu0 0.0
    %292 = vmatprep.subr.mxu0 0.0
    %293 = vmatpush1.msra.mxu0 0.0
    %294 = vmatprep.subr.mxu0 0.0
    %295 = vmatpush1.msra.mxu0 0.0
    %296 = vmatprep.subr.mxu0 0.0
    %297 = vmatpush1.msra.mxu0 0.0
    %298 = vmatprep.subr.mxu0 0.0
    %299 = vmatpush1.msra.mxu0 0.0
    %300 = vmatprep.subr.mxu0 0.0
    %301 = vmatpush1.msra.mxu0 0.0
    %302 = vmatprep.subr.mxu0 0.0
    %303 = vmatpush1.msra.mxu0 0.0
    %304 = vmatprep.subr.mxu0 0.0
    %305 = vmatpush1.msra.mxu0 0.0
    %306 = vmatprep.subr.mxu0 0.0
    %307 = vmatpush1.msra.mxu0 0.0
    %308 = vmatprep.subr.mxu0 0.0
    %309 = vmatpush1.msra.mxu0 0.0
    %310 = vmatprep.subr.mxu0 0.0
    %311 = vmatpush1.msra.mxu0 0.0
    %312 = vmatprep.subr.mxu0 0.0
    %313 = vmatpush1.msra.mxu0 0.0
    %314 = vmatprep.subr.mxu0 0.0
    %315 = vmatpush1.msra.mxu0 0.0
    %316 = vmatprep.subr.mxu0 0.0
    %317 = vmatpush1.msra.mxu0 0.0
    %318 = vmatprep.subr.mxu0 0.0
    %319 = vmatpush1.msra.mxu0 0.0
    %320 = vmatprep.subr.mxu0 0.0
    %321 = vmatpush1.msra.mxu0 0.0
    %322 = vmatprep.subr.mxu0 0.0
    %323 = vmatpush1.msra.mxu0 0.0
    %324 = vmatprep.subr.mxu0 0.0
    %325 = vmatpush1.msra.mxu0 0.0
    %326 = vmatprep.subr.mxu0 0.0
    %327 = vmatpush1.msra.mxu0 0.0
    %328 = vmatprep.subr.mxu0 0.0
    %329 = vmatpush1.msra.mxu0 0.0
    %330 = vmatprep.mubr.f32.mxu0 0.0
    %331 = vmatmul.mubr.f32.gmra.mrb[0].mxu0 %v264
    %v332 = vpop.f32.mrb[0].mxu0
    %v333 = vadd.f32 0.0, %v332
    %v334 = vpop.f32.mrb[0].mxu0
    %v335 = vadd.f32 0.0, %v334
    %336 = vdwg.mxu0
    %v337 = vadd.f32 %v244, %v333
    %v338 = vadd.f32 %v245, %v335
    %v339 = vxor.u32 %v337, 2147483648
    %v340 = vxor.u32 %v338, 2147483648
    %v341 = vmul.f32 %v339, 1.442695
    %v342 = vpow.pop %v341
    %v343 = vmul.f32 %v340, 1.442695
    %v344 = vpow.pop %v343
    %v345 = vadd.f32 %v342, 1.0
    %v346 = vadd.f32 %v344, 1.0
    %v347 = vrcp.pop %v345
    %v348 = vmul.f32 1.0, %v347
    %v349 = vrcp.pop %v346
    %v350 = vmul.f32 1.0, %v349
    %v351 = vtanh.pop %v338
    %v352 = vmul.f32 %v348, 0.0
    %354 = vrot.lane.b32.xlu0 %v351, 64
    %v355 = vpop.permute.xlu0 %354
    %v357 = vmul.f32 %v348, %v355
    %359 = vrot.lane.b32.xlu0 %v357, 64
    %v360 = vpop.permute.xlu0 %359
    %v362 = vadd.f32 %v352, %v360
    %v363 = vtanh.pop %v362
    %365 = vrot.lane.b32.xlu0 %v363, 64
    %v366 = vpop.permute.xlu0 %365
    %v368 = vmul.f32 %v350, %v366
    %v369 = vld [vmem:[#allocation2 + $0x10] sm:$0xff]
    %v370 = vld [vmem:[#allocation2 + $0x18] sm:$0xff]
    %v372 = vsel %vm262, %v368, 0
    %374 = vmatprep.subr.mxu0 %v247
    %375 = vmatpush1.msra.mxu0 %v246
    %376 = vmatprep.subr.mxu0 %v249
    %377 = vmatpush1.msra.mxu0 %v248
    %378 = vmatprep.subr.mxu0 %v251
    %379 = vmatpush1.msra.mxu0 %v250
    %380 = vmatprep.subr.mxu0 %v253
    %381 = vmatpush1.msra.mxu0 %v252
    %382 = vmatprep.subr.mxu0 %v255
    %383 = vmatpush1.msra.mxu0 %v254
    %384 = vmatprep.subr.mxu0 %v257
    %385 = vmatpush1.msra.mxu0 %v256
    %386 = vmatprep.subr.mxu0 %v259
    %387 = vmatpush1.msra.mxu0 %v258
    %388 = vmatprep.subr.mxu0 %v261
    %389 = vmatpush1.msra.mxu0 %v260
    %390 = vmatprep.subr.mxu0 0.0
    %391 = vmatpush1.msra.mxu0 0.0
    %392 = vmatprep.subr.mxu0 0.0
    %393 = vmatpush1.msra.mxu0 0.0
    %394 = vmatprep.subr.mxu0 0.0
    %395 = vmatpush1.msra.mxu0 0.0
    %396 = vmatprep.subr.mxu0 0.0
    %397 = vmatpush1.msra.mxu0 0.0
    %398 = vmatprep.subr.mxu0 0.0
    %399 = vmatpush1.msra.mxu0 0.0
    %400 = vmatprep.subr.mxu0 0.0
    %401 = vmatpush1.msra.mxu0 0.0
    %402 = vmatprep.subr.mxu0 0.0
    %403 = vmatpush1.msra.mxu0 0.0
    %404 = vmatprep.subr.mxu0 0.0
    %405 = vmatpush1.msra.mxu0 0.0
    %406 = vmatprep.subr.mxu0 0.0
    %407 = vmatpush1.msra.mxu0 0.0
    %408 = vmatprep.subr.mxu0 0.0
    %409 = vmatpush1.msra.mxu0 0.0
    %410 = vmatprep.subr.mxu0 0.0
    %411 = vmatpush1.msra.mxu0 0.0
    %412 = vmatprep.subr.mxu0 0.0
    %413 = vmatpush1.msra.mxu0 0.0
    %414 = vmatprep.subr.mxu0 0.0
    %415 = vmatpush1.msra.mxu0 0.0
    %416 = vmatprep.subr.mxu0 0.0
    %417 = vmatpush1.msra.mxu0 0.0
    %418 = vmatprep.subr.mxu0 0.0
    %419 = vmatpush1.msra.mxu0 0.0
    %420 = vmatprep.subr.mxu0 0.0
    %421 = vmatpush1.msra.mxu0 0.0
    %422 = vmatprep.subr.mxu0 0.0
    %423 = vmatpush1.msra.mxu0 0.0
    %424 = vmatprep.subr.mxu0 0.0
    %425 = vmatpush1.msra.mxu0 0.0
    %426 = vmatprep.subr.mxu0 0.0
    %427 = vmatpush1.msra.mxu0 0.0
    %428 = vmatprep.subr.mxu0 0.0
    %429 = vmatpush1.msra.mxu0 0.0
    %430 = vmatprep.subr.mxu0 0.0
    %431 = vmatpush1.msra.mxu0 0.0
    %432 = vmatprep.subr.mxu0 0.0
    %433 = vmatpush1.msra.mxu0 0.0
    %434 = vmatprep.subr.mxu0 0.0
    %435 = vmatpush1.msra.mxu0 0.0
    %436 = vmatprep.subr.mxu0 0.0
    %437 = vmatpush1.msra.mxu0 0.0
    %438 = vmatprep.mubr.f32.mxu0 0.0
    %439 = vmatmul.mubr.f32.gmra.mrb[0].mxu0 %v372
    %v440 = vpop.f32.mrb[0].mxu0
    %v441 = vadd.f32 0.0, %v440
    %v442 = vpop.f32.mrb[0].mxu0
    %v443 = vadd.f32 0.0, %v442
    %444 = vdwg.mxu0
    %v445 = vadd.f32 %v369, %v441
    %v446 = vadd.f32 %v370, %v443
    %v447 = vxor.u32 %v445, 2147483648
    %v448 = vxor.u32 %v446, 2147483648
    %v449 = vmul.f32 %v447, 1.442695
    %v450 = vpow.pop %v449
    %v451 = vmul.f32 %v448, 1.442695
    %v452 = vpow.pop %v451
    %v453 = vadd.f32 %v450, 1.0
    %v454 = vadd.f32 %v452, 1.0
    %v455 = vrcp.pop %v453
    %v456 = vmul.f32 1.0, %v455
    %v457 = vrcp.pop %v454
    %v458 = vmul.f32 1.0, %v457
    %v459 = vtanh.pop %v446
    %v460 = vmul.f32 %v456, %v362
    %462 = vrot.lane.b32.xlu0 %v459, 64
    %v463 = vpop.permute.xlu0 %462
    %v465 = vmul.f32 %v456, %v463
    %467 = vrot.lane.b32.xlu0 %v465, 64
    %v468 = vpop.permute.xlu0 %467
    %v470 = vadd.f32 %v460, %v468
    %v471 = vtanh.pop %v470
    %473 = vrot.lane.b32.xlu0 %v471, 64
    %v474 = vpop.permute.xlu0 %473
    %v476 = vmul.f32 %v458, %v474
    %v477 = vld [vmem:[#allocation2 + $0x20] sm:$0xff]
    %v478 = vld [vmem:[#allocation2 + $0x28] sm:$0xff]
    %v480 = vsel %vm262, %v476, 0
    %482 = vmatprep.subr.mxu0 %v247
    %483 = vmatpush1.msra.mxu0 %v246
    %484 = vmatprep.subr.mxu0 %v249
    %485 = vmatpush1.msra.mxu0 %v248
    %486 = vmatprep.subr.mxu0 %v251
    %487 = vmatpush1.msra.mxu0 %v250
    %488 = vmatprep.subr.mxu0 %v253
    %489 = vmatpush1.msra.mxu0 %v252
    %490 = vmatprep.subr.mxu0 %v255
    %491 = vmatpush1.msra.mxu0 %v254
    %492 = vmatprep.subr.mxu0 %v257
    %493 = vmatpush1.msra.mxu0 %v256
    %494 = vmatprep.subr.mxu0 %v259
    %495 = vmatpush1.msra.mxu0 %v258
    %496 = vmatprep.subr.mxu0 %v261
    %497 = vmatpush1.msra.mxu0 %v260
    %498 = vmatprep.subr.mxu0 0.0
    %499 = vmatpush1.msra.mxu0 0.0
    %500 = vmatprep.subr.mxu0 0.0
    %501 = vmatpush1.msra.mxu0 0.0
    %502 = vmatprep.subr.mxu0 0.0
    %503 = vmatpush1.msra.mxu0 0.0
    %504 = vmatprep.subr.mxu0 0.0
    %505 = vmatpush1.msra.mxu0 0.0
    %506 = vmatprep.subr.mxu0 0.0
    %507 = vmatpush1.msra.mxu0 0.0
    %508 = vmatprep.subr.mxu0 0.0
    %509 = vmatpush1.msra.mxu0 0.0
    %510 = vmatprep.subr.mxu0 0.0
    %511 = vmatpush1.msra.mxu0 0.0
    %512 = vmatprep.subr.mxu0 0.0
    %513 = vmatpush1.msra.mxu0 0.0
    %514 = vmatprep.subr.mxu0 0.0
    %515 = vmatpush1.msra.mxu0 0.0
    %516 = vmatprep.subr.mxu0 0.0
    %517 = vmatpush1.msra.mxu0 0.0
    %518 = vmatprep.subr.mxu0 0.0
    %519 = vmatpush1.msra.mxu0 0.0
    %520 = vmatprep.subr.mxu0 0.0
    %521 = vmatpush1.msra.mxu0 0.0
    %522 = vmatprep.subr.mxu0 0.0
    %523 = vmatpush1.msra.mxu0 0.0
    %524 = vmatprep.subr.mxu0 0.0
    %525 = vmatpush1.msra.mxu0 0.0
    %526 = vmatprep.subr.mxu0 0.0
    %527 = vmatpush1.msra.mxu0 0.0
    %528 = vmatprep.subr.mxu0 0.0
    %529 = vmatpush1.msra.mxu0 0.0
    %530 = vmatprep.subr.mxu0 0.0
    %531 = vmatpush1.msra.mxu0 0.0
    %532 = vmatprep.subr.mxu0 0.0
    %533 = vmatpush1.msra.mxu0 0.0
    %534 = vmatprep.subr.mxu0 0.0
    %535 = vmatpush1.msra.mxu0 0.0
    %536 = vmatprep.subr.mxu0 0.0
    %537 = vmatpush1.msra.mxu0 0.0
    %538 = vmatprep.subr.mxu0 0.0
    %539 = vmatpush1.msra.mxu0 0.0
    %540 = vmatprep.subr.mxu0 0.0
    %541 = vmatpush1.msra.mxu0 0.0
    %542 = vmatprep.subr.mxu0 0.0
    %543 = vmatpush1.msra.mxu0 0.0
    %544 = vmatprep.subr.mxu0 0.0
    %545 = vmatpush1.msra.mxu0 0.0
    %546 = vmatprep.mubr.f32.mxu0 0.0
    %547 = vmatmul.mubr.f32.gmra.mrb[0].mxu0 %v480
    %v548 = vpop.f32.mrb[0].mxu0
    %v549 = vadd.f32 0.0, %v548
    %v550 = vpop.f32.mrb[0].mxu0
    %v551 = vadd.f32 0.0, %v550
    %552 = vdwg.mxu0
    %v553 = vadd.f32 %v477, %v549
    %v554 = vadd.f32 %v478, %v551
    %v555 = vxor.u32 %v553, 2147483648
    %v556 = vxor.u32 %v554, 2147483648
    %v557 = vmul.f32 %v555, 1.442695
    %v558 = vpow.pop %v557
    %v559 = vmul.f32 %v556, 1.442695
    %v560 = vpow.pop %v559
    %v561 = vadd.f32 %v558, 1.0
    %v562 = vadd.f32 %v560, 1.0
    %v563 = vrcp.pop %v561
    %v564 = vmul.f32 1.0, %v563
    %v565 = vrcp.pop %v562
    %v566 = vmul.f32 1.0, %v565
    %v567 = vtanh.pop %v554
    %v568 = vmul.f32 %v564, %v470
    %570 = vrot.lane.b32.xlu0 %v567, 64
    %v571 = vpop.permute.xlu0 %570
    %v573 = vmul.f32 %v564, %v571
    %575 = vrot.lane.b32.xlu0 %v573, 64
    %v576 = vpop.permute.xlu0 %575
    %v578 = vadd.f32 %v568, %v576
    %v579 = vtanh.pop %v578
    %581 = vrot.lane.b32.xlu0 %v579, 64
    %v582 = vpop.permute.xlu0 %581
    %v584 = vmul.f32 %v566, %v582
    %v585 = vld [vmem:[#allocation2 + $0x30] sm:$0xff]
    %v586 = vld [vmem:[#allocation2 + $0x38] sm:$0xff]
    %v588 = vsel %vm262, %v584, 0
    %590 = vmatprep.subr.mxu0 %v247
    %591 = vmatpush1.msra.mxu0 %v246
    %592 = vmatprep.subr.mxu0 %v249
    %593 = vmatpush1.msra.mxu0 %v248
    %594 = vmatprep.subr.mxu0 %v251
    %595 = vmatpush1.msra.mxu0 %v250
    %596 = vmatprep.subr.mxu0 %v253
    %597 = vmatpush1.msra.mxu0 %v252
    %598 = vmatprep.subr.mxu0 %v255
    %599 = vmatpush1.msra.mxu0 %v254
    %600 = vmatprep.subr.mxu0 %v257
    %601 = vmatpush1.msra.mxu0 %v256
    %602 = vmatprep.subr.mxu0 %v259
    %603 = vmatpush1.msra.mxu0 %v258
    %604 = vmatprep.subr.mxu0 %v261
    %605 = vmatpush1.msra.mxu0 %v260
    %606 = vmatprep.subr.mxu0 0.0
    %607 = vmatpush1.msra.mxu0 0.0
    %608 = vmatprep.subr.mxu0 0.0
    %609 = vmatpush1.msra.mxu0 0.0
    %610 = vmatprep.subr.mxu0 0.0
    %611 = vmatpush1.msra.mxu0 0.0
    %612 = vmatprep.subr.mxu0 0.0
    %613 = vmatpush1.msra.mxu0 0.0
    %614 = vmatprep.subr.mxu0 0.0
    %615 = vmatpush1.msra.mxu0 0.0
    %616 = vmatprep.subr.mxu0 0.0
    %617 = vmatpush1.msra.mxu0 0.0
    %618 = vmatprep.subr.mxu0 0.0
    %619 = vmatpush1.msra.mxu0 0.0
    %620 = vmatprep.subr.mxu0 0.0
    %621 = vmatpush1.msra.mxu0 0.0
    %622 = vmatprep.subr.mxu0 0.0
    %623 = vmatpush1.msra.mxu0 0.0
    %624 = vmatprep.subr.mxu0 0.0
    %625 = vmatpush1.msra.mxu0 0.0
    %626 = vmatprep.subr.mxu0 0.0
    %627 = vmatpush1.msra.mxu0 0.0
    %628 = vmatprep.subr.mxu0 0.0
    %629 = vmatpush1.msra.mxu0 0.0
    %630 = vmatprep.subr.mxu0 0.0
    %631 = vmatpush1.msra.mxu0 0.0
    %632 = vmatprep.subr.mxu0 0.0
    %633 = vmatpush1.msra.mxu0 0.0
    %634 = vmatprep.subr.mxu0 0.0
    %635 = vmatpush1.msra.mxu0 0.0
    %636 = vmatprep.subr.mxu0 0.0
    %637 = vmatpush1.msra.mxu0 0.0
    %638 = vmatprep.subr.mxu0 0.0
    %639 = vmatpush1.msra.mxu0 0.0
    %640 = vmatprep.subr.mxu0 0.0
    %641 = vmatpush1.msra.mxu0 0.0
    %642 = vmatprep.subr.mxu0 0.0
    %643 = vmatpush1.msra.mxu0 0.0
    %644 = vmatprep.subr.mxu0 0.0
    %645 = vmatpush1.msra.mxu0 0.0
    %646 = vmatprep.subr.mxu0 0.0
    %647 = vmatpush1.msra.mxu0 0.0
    %648 = vmatprep.subr.mxu0 0.0
    %649 = vmatpush1.msra.mxu0 0.0
    %650 = vmatprep.subr.mxu0 0.0
    %651 = vmatpush1.msra.mxu0 0.0
    %652 = vmatprep.subr.mxu0 0.0
    %653 = vmatpush1.msra.mxu0 0.0
    %654 = vmatprep.mubr.f32.mxu0 0.0
    %655 = vmatmul.mubr.f32.gmra.mrb[0].mxu0 %v588
    %v656 = vpop.f32.mrb[0].mxu0
    %v657 = vadd.f32 0.0, %v656
    %v658 = vpop.f32.mrb[0].mxu0
    %v659 = vadd.f32 0.0, %v658
    %660 = vdwg.mxu0
    %v661 = vadd.f32 %v585, %v657
    %v662 = vadd.f32 %v586, %v659
    %v663 = vxor.u32 %v661, 2147483648
    %v664 = vxor.u32 %v662, 2147483648
    %v665 = vmul.f32 %v663, 1.442695
    %v666 = vpow.pop %v665
    %v667 = vmul.f32 %v664, 1.442695
    %v668 = vpow.pop %v667
    %v669 = vadd.f32 %v666, 1.0
    %v670 = vadd.f32 %v668, 1.0
    %v671 = vrcp.pop %v669
    %v672 = vmul.f32 1.0, %v671
    %v673 = vrcp.pop %v670
    %v674 = vmul.f32 1.0, %v673
    %v675 = vtanh.pop %v662
    %v676 = vmul.f32 %v672, %v578
    %678 = vrot.lane.b32.xlu0 %v675, 64
    %v679 = vpop.permute.xlu0 %678
    %v681 = vmul.f32 %v672, %v679
    %683 = vrot.lane.b32.xlu0 %v681, 64
    %v684 = vpop.permute.xlu0 %683
    %v686 = vadd.f32 %v676, %v684
    %v687 = vtanh.pop %v686
    %689 = vrot.lane.b32.xlu0 %v687, 64
    %v690 = vpop.permute.xlu0 %689
    %v692 = vmul.f32 %v674, %v690
    %v693 = vld [vmem:[#allocation2 + $0x40] sm:$0xff]
    %v694 = vld [vmem:[#allocation2 + $0x48] sm:$0xff]
    %v696 = vsel %vm262, %v692, 0
    %698 = vmatprep.subr.mxu0 %v247
    %699 = vmatpush1.msra.mxu0 %v246
    %700 = vmatprep.subr.mxu0 %v249
    %701 = vmatpush1.msra.mxu0 %v248
    %702 = vmatprep.subr.mxu0 %v251
    %703 = vmatpush1.msra.mxu0 %v250
    %704 = vmatprep.subr.mxu0 %v253
    %705 = vmatpush1.msra.mxu0 %v252
    %706 = vmatprep.subr.mxu0 %v255
    %707 = vmatpush1.msra.mxu0 %v254
    %708 = vmatprep.subr.mxu0 %v257
    %709 = vmatpush1.msra.mxu0 %v256
    %710 = vmatprep.subr.mxu0 %v259
    %711 = vmatpush1.msra.mxu0 %v258
    %712 = vmatprep.subr.mxu0 %v261
    %713 = vmatpush1.msra.mxu0 %v260
    %714 = vmatprep.subr.mxu0 0.0
    %715 = vmatpush1.msra.mxu0 0.0
    %716 = vmatprep.subr.mxu0 0.0
    %717 = vmatpush1.msra.mxu0 0.0
    %718 = vmatprep.subr.mxu0 0.0
    %719 = vmatpush1.msra.mxu0 0.0
    %720 = vmatprep.subr.mxu0 0.0
    %721 = vmatpush1.msra.mxu0 0.0
    %722 = vmatprep.subr.mxu0 0.0
    %723 = vmatpush1.msra.mxu0 0.0
    %724 = vmatprep.subr.mxu0 0.0
    %725 = vmatpush1.msra.mxu0 0.0
    %726 = vmatprep.subr.mxu0 0.0
    %727 = vmatpush1.msra.mxu0 0.0
    %728 = vmatprep.subr.mxu0 0.0
    %729 = vmatpush1.msra.mxu0 0.0
    %730 = vmatprep.subr.mxu0 0.0
    %731 = vmatpush1.msra.mxu0 0.0
    %732 = vmatprep.subr.mxu0 0.0
    %733 = vmatpush1.msra.mxu0 0.0
    %734 = vmatprep.subr.mxu0 0.0
    %735 = vmatpush1.msra.mxu0 0.0
    %736 = vmatprep.subr.mxu0 0.0
    %737 = vmatpush1.msra.mxu0 0.0
    %738 = vmatprep.subr.mxu0 0.0
    %739 = vmatpush1.msra.mxu0 0.0
    %740 = vmatprep.subr.mxu0 0.0
    %741 = vmatpush1.msra.mxu0 0.0
    %742 = vmatprep.subr.mxu0 0.0
    %743 = vmatpush1.msra.mxu0 0.0
    %744 = vmatprep.subr.mxu0 0.0
    %745 = vmatpush1.msra.mxu0 0.0
    %746 = vmatprep.subr.mxu0 0.0
    %747 = vmatpush1.msra.mxu0 0.0
    %748 = vmatprep.subr.mxu0 0.0
    %749 = vmatpush1.msra.mxu0 0.0
    %750 = vmatprep.subr.mxu0 0.0
    %751 = vmatpush1.msra.mxu0 0.0
    %752 = vmatprep.subr.mxu0 0.0
    %753 = vmatpush1.msra.mxu0 0.0
    %754 = vmatprep.subr.mxu0 0.0
    %755 = vmatpush1.msra.mxu0 0.0
    %756 = vmatprep.subr.mxu0 0.0
    %757 = vmatpush1.msra.mxu0 0.0
    %758 = vmatprep.subr.mxu0 0.0
    %759 = vmatpush1.msra.mxu0 0.0
    %760 = vmatprep.subr.mxu0 0.0
    %761 = vmatpush1.msra.mxu0 0.0
    %762 = vmatprep.mubr.f32.mxu0 0.0
    %763 = vmatmul.mubr.f32.gmra.mrb[0].mxu0 %v696
    %v764 = vpop.f32.mrb[0].mxu0
    %v765 = vadd.f32 0.0, %v764
    %v766 = vpop.f32.mrb[0].mxu0
    %v767 = vadd.f32 0.0, %v766
    %768 = vdwg.mxu0
    %v769 = vadd.f32 %v693, %v765
    %v770 = vadd.f32 %v694, %v767
    %v771 = vxor.u32 %v769, 2147483648
    %v772 = vxor.u32 %v770, 2147483648
    %v773 = vmul.f32 %v771, 1.442695
    %v774 = vpow.pop %v773
    %v775 = vmul.f32 %v772, 1.442695
    %v776 = vpow.pop %v775
    %v777 = vadd.f32 %v774, 1.0
    %v778 = vadd.f32 %v776, 1.0
    %v779 = vrcp.pop %v777
    %v780 = vmul.f32 1.0, %v779
    %v781 = vrcp.pop %v778
    %v782 = vmul.f32 1.0, %v781
    %v783 = vtanh.pop %v770
    %v784 = vmul.f32 %v780, %v686
    %786 = vrot.lane.b32.xlu0 %v783, 64
    %v787 = vpop.permute.xlu0 %786
    %v789 = vmul.f32 %v780, %v787
    %791 = vrot.lane.b32.xlu0 %v789, 64
    %v792 = vpop.permute.xlu0 %791
    %v794 = vadd.f32 %v784, %v792
    %v795 = vtanh.pop %v794
    %797 = vrot.lane.b32.xlu0 %v795, 64
    %v798 = vpop.permute.xlu0 %797
    %v800 = vmul.f32 %v782, %v798
    %v801 = vld [vmem:[#allocation2 + $0x50] sm:$0xff]
    %v802 = vld [vmem:[#allocation2 + $0x58] sm:$0xff]
    %v804 = vsel %vm262, %v800, 0
    %806 = vmatprep.subr.mxu0 %v247
    %807 = vmatpush1.msra.mxu0 %v246
    %808 = vmatprep.subr.mxu0 %v249
    %809 = vmatpush1.msra.mxu0 %v248
    %810 = vmatprep.subr.mxu0 %v251
    %811 = vmatpush1.msra.mxu0 %v250
    %812 = vmatprep.subr.mxu0 %v253
    %813 = vmatpush1.msra.mxu0 %v252
    %814 = vmatprep.subr.mxu0 %v255
    %815 = vmatpush1.msra.mxu0 %v254
    %816 = vmatprep.subr.mxu0 %v257
    %817 = vmatpush1.msra.mxu0 %v256
    %818 = vmatprep.subr.mxu0 %v259
    %819 = vmatpush1.msra.mxu0 %v258
    %820 = vmatprep.subr.mxu0 %v261
    %821 = vmatpush1.msra.mxu0 %v260
    %822 = vmatprep.subr.mxu0 0.0
    %823 = vmatpush1.msra.mxu0 0.0
    %824 = vmatprep.subr.mxu0 0.0
    %825 = vmatpush1.msra.mxu0 0.0
    %826 = vmatprep.subr.mxu0 0.0
    %827 = vmatpush1.msra.mxu0 0.0
    %828 = vmatprep.subr.mxu0 0.0
    %829 = vmatpush1.msra.mxu0 0.0
    %830 = vmatprep.subr.mxu0 0.0
    %831 = vmatpush1.msra.mxu0 0.0
    %832 = vmatprep.subr.mxu0 0.0
    %833 = vmatpush1.msra.mxu0 0.0
    %834 = vmatprep.subr.mxu0 0.0
    %835 = vmatpush1.msra.mxu0 0.0
    %836 = vmatprep.subr.mxu0 0.0
    %837 = vmatpush1.msra.mxu0 0.0
    %838 = vmatprep.subr.mxu0 0.0
    %839 = vmatpush1.msra.mxu0 0.0
    %840 = vmatprep.subr.mxu0 0.0
    %841 = vmatpush1.msra.mxu0 0.0
    %842 = vmatprep.subr.mxu0 0.0
    %843 = vmatpush1.msra.mxu0 0.0
    %844 = vmatprep.subr.mxu0 0.0
    %845 = vmatpush1.msra.mxu0 0.0
    %846 = vmatprep.subr.mxu0 0.0
    %847 = vmatpush1.msra.mxu0 0.0
    %848 = vmatprep.subr.mxu0 0.0
    %849 = vmatpush1.msra.mxu0 0.0
    %850 = vmatprep.subr.mxu0 0.0
    %851 = vmatpush1.msra.mxu0 0.0
    %852 = vmatprep.subr.mxu0 0.0
    %853 = vmatpush1.msra.mxu0 0.0
    %854 = vmatprep.subr.mxu0 0.0
    %855 = vmatpush1.msra.mxu0 0.0
    %856 = vmatprep.subr.mxu0 0.0
    %857 = vmatpush1.msra.mxu0 0.0
    %858 = vmatprep.subr.mxu0 0.0
    %859 = vmatpush1.msra.mxu0 0.0
    %860 = vmatprep.subr.mxu0 0.0
    %861 = vmatpush1.msra.mxu0 0.0
    %862 = vmatprep.subr.mxu0 0.0
    %863 = vmatpush1.msra.mxu0 0.0
    %864 = vmatprep.subr.mxu0 0.0
    %865 = vmatpush1.msra.mxu0 0.0
    %866 = vmatprep.subr.mxu0 0.0
    %867 = vmatpush1.msra.mxu0 0.0
    %868 = vmatprep.subr.mxu0 0.0
    %869 = vmatpush1.msra.mxu0 0.0
    %870 = vmatprep.mubr.f32.mxu0 0.0
    %871 = vmatmul.mubr.f32.gmra.mrb[0].mxu0 %v804
    %v872 = vpop.f32.mrb[0].mxu0
    %v873 = vadd.f32 0.0, %v872
    %v874 = vpop.f32.mrb[0].mxu0
    %v875 = vadd.f32 0.0, %v874
    %876 = vdwg.mxu0
    %v877 = vadd.f32 %v801, %v873
    %v878 = vadd.f32 %v802, %v875
    %v879 = vxor.u32 %v877, 2147483648
    %v880 = vxor.u32 %v878, 2147483648
    %v881 = vmul.f32 %v879, 1.442695
    %v882 = vpow.pop %v881
    %v883 = vmul.f32 %v880, 1.442695
    %v884 = vpow.pop %v883
    %v885 = vadd.f32 %v882, 1.0
    %v886 = vadd.f32 %v884, 1.0
    %v887 = vrcp.pop %v885
    %v888 = vmul.f32 1.0, %v887
    %v889 = vrcp.pop %v886
    %v890 = vmul.f32 1.0, %v889
    %v891 = vtanh.pop %v878
    %v892 = vmul.f32 %v888, %v794
    %894 = vrot.lane.b32.xlu0 %v891, 64
    %v895 = vpop.permute.xlu0 %894
    %v897 = vmul.f32 %v888, %v895
    %899 = vrot.lane.b32.xlu0 %v897, 64
    %v900 = vpop.permute.xlu0 %899
    %v902 = vadd.f32 %v892, %v900
    %v903 = vtanh.pop %v902
    %905 = vrot.lane.b32.xlu0 %v903, 64
    %v906 = vpop.permute.xlu0 %905
    %v908 = vmul.f32 %v890, %v906
    %v909 = vld [vmem:[#allocation2 + $0x60] sm:$0xff]
    %v910 = vld [vmem:[#allocation2 + $0x68] sm:$0xff]
    %v912 = vsel %vm262, %v908, 0
    %914 = vmatprep.subr.mxu0 %v247
    %915 = vmatpush1.msra.mxu0 %v246
    %916 = vmatprep.subr.mxu0 %v249
    %917 = vmatpush1.msra.mxu0 %v248
    %918 = vmatprep.subr.mxu0 %v251
    %919 = vmatpush1.msra.mxu0 %v250
    %920 = vmatprep.subr.mxu0 %v253
    %921 = vmatpush1.msra.mxu0 %v252
    %922 = vmatprep.subr.mxu0 %v255
    %923 = vmatpush1.msra.mxu0 %v254
    %924 = vmatprep.subr.mxu0 %v257
    %925 = vmatpush1.msra.mxu0 %v256
    %926 = vmatprep.subr.mxu0 %v259
    %927 = vmatpush1.msra.mxu0 %v258
    %928 = vmatprep.subr.mxu0 %v261
    %929 = vmatpush1.msra.mxu0 %v260
    %930 = vmatprep.subr.mxu0 0.0
    %931 = vmatpush1.msra.mxu0 0.0
    %932 = vmatprep.subr.mxu0 0.0
    %933 = vmatpush1.msra.mxu0 0.0
    %934 = vmatprep.subr.mxu0 0.0
    %935 = vmatpush1.msra.mxu0 0.0
    %936 = vmatprep.subr.mxu0 0.0
    %937 = vmatpush1.msra.mxu0 0.0
    %938 = vmatprep.subr.mxu0 0.0
    %939 = vmatpush1.msra.mxu0 0.0
    %940 = vmatprep.subr.mxu0 0.0
    %941 = vmatpush1.msra.mxu0 0.0
    %942 = vmatprep.subr.mxu0 0.0
    %943 = vmatpush1.msra.mxu0 0.0
    %944 = vmatprep.subr.mxu0 0.0
    %945 = vmatpush1.msra.mxu0 0.0
    %946 = vmatprep.subr.mxu0 0.0
    %947 = vmatpush1.msra.mxu0 0.0
    %948 = vmatprep.subr.mxu0 0.0
    %949 = vmatpush1.msra.mxu0 0.0
    %950 = vmatprep.subr.mxu0 0.0
    %951 = vmatpush1.msra.mxu0 0.0
    %952 = vmatprep.subr.mxu0 0.0
    %953 = vmatpush1.msra.mxu0 0.0
    %954 = vmatprep.subr.mxu0 0.0
    %955 = vmatpush1.msra.mxu0 0.0
    %956 = vmatprep.subr.mxu0 0.0
    %957 = vmatpush1.msra.mxu0 0.0
    %958 = vmatprep.subr.mxu0 0.0
    %959 = vmatpush1.msra.mxu0 0.0
    %960 = vmatprep.subr.mxu0 0.0
    %961 = vmatpush1.msra.mxu0 0.0
    %962 = vmatprep.subr.mxu0 0.0
    %963 = vmatpush1.msra.mxu0 0.0
    %964 = vmatprep.subr.mxu0 0.0
    %965 = vmatpush1.msra.mxu0 0.0
    %966 = vmatprep.subr.mxu0 0.0
    %967 = vmatpush1.msra.mxu0 0.0
    %968 = vmatprep.subr.mxu0 0.0
    %969 = vmatpush1.msra.mxu0 0.0
    %970 = vmatprep.subr.mxu0 0.0
    %971 = vmatpush1.msra.mxu0 0.0
    %972 = vmatprep.subr.mxu0 0.0
    %973 = vmatpush1.msra.mxu0 0.0
    %974 = vmatprep.subr.mxu0 0.0
    %975 = vmatpush1.msra.mxu0 0.0
    %976 = vmatprep.subr.mxu0 0.0
    %977 = vmatpush1.msra.mxu0 0.0
    %978 = vmatprep.mubr.f32.mxu0 0.0
    %979 = vmatmul.mubr.f32.gmra.mrb[0].mxu0 %v912
    %v980 = vpop.f32.mrb[0].mxu0
    %v981 = vadd.f32 0.0, %v980
    %v982 = vpop.f32.mrb[0].mxu0
    %v983 = vadd.f32 0.0, %v982
    %984 = vdwg.mxu0
    %v985 = vadd.f32 %v909, %v981
    %v986 = vadd.f32 %v910, %v983
    %v987 = vxor.u32 %v985, 2147483648
    %v988 = vxor.u32 %v986, 2147483648
    %v989 = vmul.f32 %v987, 1.442695
    %v990 = vpow.pop %v989
    %v991 = vmul.f32 %v988, 1.442695
    %v992 = vpow.pop %v991
    %v993 = vadd.f32 %v990, 1.0
    %v994 = vadd.f32 %v992, 1.0
    %v995 = vrcp.pop %v993
    %v996 = vmul.f32 1.0, %v995
    %v997 = vrcp.pop %v994
    %v998 = vmul.f32 1.0, %v997
    %v999 = vtanh.pop %v986
    %v1000 = vmul.f32 %v996, %v902
    %1002 = vrot.lane.b32.xlu0 %v999, 64
    %v1003 = vpop.permute.xlu0 %1002
    %v1005 = vmul.f32 %v996, %v1003
    %1007 = vrot.lane.b32.xlu0 %v1005, 64
    %v1008 = vpop.permute.xlu0 %1007
    %v1010 = vadd.f32 %v1000, %v1008
    %v1011 = vtanh.pop %v1010
    %1013 = vrot.lane.b32.xlu0 %v1011, 64
    %v1014 = vpop.permute.xlu0 %1013
    %v1016 = vmul.f32 %v998, %v1014
    %v1017 = vld [vmem:[#allocation2 + $0x70] sm:$0xff]
    %v1018 = vld [vmem:[#allocation2 + $0x78] sm:$0xff]
    %v1020 = vsel %vm262, %v1016, 0
    %1022 = vmatprep.subr.mxu0 %v247
    %1023 = vmatpush1.msra.mxu0 %v246
    %1024 = vmatprep.subr.mxu0 %v249
    %1025 = vmatpush1.msra.mxu0 %v248
    %1026 = vmatprep.subr.mxu0 %v251
    %1027 = vmatpush1.msra.mxu0 %v250
    %1028 = vmatprep.subr.mxu0 %v253
    %1029 = vmatpush1.msra.mxu0 %v252
    %1030 = vmatprep.subr.mxu0 %v255
    %1031 = vmatpush1.msra.mxu0 %v254
    %1032 = vmatprep.subr.mxu0 %v257
    %1033 = vmatpush1.msra.mxu0 %v256
    %1034 = vmatprep.subr.mxu0 %v259
    %1035 = vmatpush1.msra.mxu0 %v258
    %1036 = vmatprep.subr.mxu0 %v261
    %1037 = vmatpush1.msra.mxu0 %v260
    %1038 = vmatprep.subr.mxu0 0.0
    %1039 = vmatpush1.msra.mxu0 0.0
    %1040 = vmatprep.subr.mxu0 0.0
    %1041 = vmatpush1.msra.mxu0 0.0
    %1042 = vmatprep.subr.mxu0 0.0
    %1043 = vmatpush1.msra.mxu0 0.0
    %1044 = vmatprep.subr.mxu0 0.0
    %1045 = vmatpush1.msra.mxu0 0.0
    %1046 = vmatprep.subr.mxu0 0.0
    %1047 = vmatpush1.msra.mxu0 0.0
    %1048 = vmatprep.subr.mxu0 0.0
    %1049 = vmatpush1.msra.mxu0 0.0
    %1050 = vmatprep.subr.mxu0 0.0
    %1051 = vmatpush1.msra.mxu0 0.0
    %1052 = vmatprep.subr.mxu0 0.0
    %1053 = vmatpush1.msra.mxu0 0.0
    %1054 = vmatprep.subr.mxu0 0.0
    %1055 = vmatpush1.msra.mxu0 0.0
    %1056 = vmatprep.subr.mxu0 0.0
    %1057 = vmatpush1.msra.mxu0 0.0
    %1058 = vmatprep.subr.mxu0 0.0
    %1059 = vmatpush1.msra.mxu0 0.0
    %1060 = vmatprep.subr.mxu0 0.0
    %1061 = vmatpush1.msra.mxu0 0.0
    %1062 = vmatprep.subr.mxu0 0.0
    %1063 = vmatpush1.msra.mxu0 0.0
    %1064 = vmatprep.subr.mxu0 0.0
    %1065 = vmatpush1.msra.mxu0 0.0
    %1066 = vmatprep.subr.mxu0 0.0
    %1067 = vmatpush1.msra.mxu0 0.0
    %1068 = vmatprep.subr.mxu0 0.0
    %1069 = vmatpush1.msra.mxu0 0.0
    %1070 = vmatprep.subr.mxu0 0.0
    %1071 = vmatpush1.msra.mxu0 0.0
    %1072 = vmatprep.subr.mxu0 0.0
    %1073 = vmatpush1.msra.mxu0 0.0
    %1074 = vmatprep.subr.mxu0 0.0
    %1075 = vmatpush1.msra.mxu0 0.0
    %1076 = vmatprep.subr.mxu0 0.0
    %1077 = vmatpush1.msra.mxu0 0.0
    %1078 = vmatprep.subr.mxu0 0.0
    %1079 = vmatpush1.msra.mxu0 0.0
    %1080 = vmatprep.subr.mxu0 0.0
    %1081 = vmatpush1.msra.mxu0 0.0
    %1082 = vmatprep.subr.mxu0 0.0
    %1083 = vmatpush1.msra.mxu0 0.0
    %1084 = vmatprep.subr.mxu0 0.0
    %1085 = vmatpush1.msra.mxu0 0.0
    %1086 = vmatprep.mubr.f32.mxu0 0.0
    %1087 = vmatmul.mubr.f32.gmra.mrb[0].mxu0 %v1020
    %v1088 = vpop.f32.mrb[0].mxu0
    %v1089 = vadd.f32 0.0, %v1088
    %v1090 = vpop.f32.mrb[0].mxu0
    %v1091 = vadd.f32 0.0, %v1090
    %1092 = vdwg.mxu0
    %v1093 = vadd.f32 %v1017, %v1089
    %v1094 = vadd.f32 %v1018, %v1091
    %v1095 = vxor.u32 %v1093, 2147483648
    %v1096 = vxor.u32 %v1094, 2147483648
    %v1097 = vmul.f32 %v1095, 1.442695
    %v1098 = vpow.pop %v1097
    %v1099 = vmul.f32 %v1096, 1.442695
    %v1100 = vpow.pop %v1099
    %v1101 = vadd.f32 %v1098, 1.0
    %v1102 = vadd.f32 %v1100, 1.0
    %v1103 = vrcp.pop %v1101
    %v1104 = vmul.f32 1.0, %v1103
    %v1105 = vrcp.pop %v1102
    %v1106 = vmul.f32 1.0, %v1105
    %v1107 = vtanh.pop %v1094
    %v1108 = vmul.f32 %v1104, %v1010
    %1110 = vrot.lane.b32.xlu0 %v1107, 64
    %v1111 = vpop.permute.xlu0 %1110
    %v1113 = vmul.f32 %v1104, %v1111
    %1115 = vrot.lane.b32.xlu0 %v1113, 64
    %v1116 = vpop.permute.xlu0 %1115
    %v1118 = vadd.f32 %v1108, %v1116
    %v1119 = vtanh.pop %v1118
    %1121 = vrot.lane.b32.xlu0 %v1119, 64
    %v1122 = vpop.permute.xlu0 %1121
    %v1124 = vmul.f32 %v1106, %v1122
    %v1125 = vld [vmem:[%s4] sm:$0x1]
    %v1127 = vlaneseq
    %v1128 = vshrl.u32 %v1127, 7
    %v1129 = vsub.s32 0, %v1128
    %v1130 = vrot.slane %v1125, %v1129
    %v1132 = vmul.f32 %v1124, %v1130
    %v1133 = vsel %vm262, %v1132, 0.0
    %1134 = vadd.xlane.f32.xlu0 %v1133
    %v1135 = vpop.xlane.xlu0 %1134
    %v1136 = vld [vmem:[#allocation3] sm:$0x1]
    %v1138 = vlaneseq
    %v1139 = vshrl.u32 %v1138, 7
    %v1140 = vsub.s32 0, %v1139
    %v1141 = vrot.slane %v1136, %v1140
    %v1143 = vadd.f32 %v1135, %v1141
    %v1144 = vxor.u32 %v1143, 2147483648
    %v1145 = vmul.f32 %v1144, 1.442695
    %v1146 = vpow.pop %v1145
    %v1147 = vadd.f32 %v1146, 1.0
    %v1148 = vrcp.pop %v1147
    %v1149 = vmul.f32 1.0, %v1148
    %vm1150 = vcmask 7168
    %1151 = vst.msk [vmem:[%s6] sm:$0xff] %vm1150, %v1149
    // Predicated region
    $region38: #{tpu_custom_call.1} parent=1 // pred_check
      _
    $region39: #{tpu_custom_call.1} parent=1 // pred_check_branch
      %1153 = sbr.rel (0) target = $region41
    $region40: #{tpu_custom_call.1} parent=1 // pred_region
      _
    $region41: #{tpu_custom_call.1} parent=1 // pred_fallthru
      _
    // Predicated region
    $region42: #{tpu_custom_call.1} parent=1 // pred_check
      _
    $region43: #{tpu_custom_call.1} parent=1 // pred_check_branch
      %1155 = sbr.rel (0) target = $region45
    $region44: #{tpu_custom_call.1} parent=1 // pred_region
      _
    $region45: #{tpu_custom_call.1} parent=1 // pred_fallthru
      _
    %1156 = vsyncpa [#allocation5], 1
    %1157 = vsyncpa [#allocation7], 1

</llo_original>
